<compile_context>
chip_gen: v6e
topology: v6e:2x2x1
jax: 0.10.0
libtpu: 0.0.40
codegen_flags: <defaults>
</compile_context>

<pallas_src>
import functools

import numpy as np
import jax
import jax.numpy as jnp
from jax.experimental import pallas as pl
from jax.experimental.pallas import tpu as pltpu


def _ceil8(n):
    return ((n + 7) // 8) * 8


# ---------------------------------------------------------------------------
# Trace-time constant builders (0/1 selection matrices, numpy).
# ---------------------------------------------------------------------------
def _sel_conv_np(B, Lin, stride, Lout, K):
    """(B*Lin-K+1, B*Lout): pick valid stride-`stride` conv columns out of a
    stride-1 conv computed over the batched-along-lanes activation."""
    Wv = B * Lin - K + 1
    M = np.zeros((Wv, B * Lout), np.float32)
    for b in range(B):
        for l in range(Lout):
            M[b * Lin + stride * l, b * Lout + l] = 1.0
    return M


def _upsample_np(B, Lin, stride, pad_l, Lpad):
    """(B*Lin, B*Lpad): zero-upsample by `stride` and zero-pad each sample block
    (transposed-conv input prep) as a single 0/1 right-multiplication."""
    M = np.zeros((B * Lin, B * Lpad), np.float32)
    for b in range(B):
        for i in range(Lin):
            M[b * Lin + i, b * Lpad + pad_l + stride * i] = 1.0
    return M


# ---------------------------------------------------------------------------
# Fused forward pass (single pallas_call, batch-blocked grid).
# ---------------------------------------------------------------------------
def cae3_forward(params, x, *, kernel_size, leaky=True, neg_slope=0.01,
                 activations=True, batch_block=None):
    K = kernel_size
    slope = float(neg_slope) if leaky else 0.0
    N, C0, L0 = x.shape

    w1, b1 = params["conv1"]
    w2, b2 = params["conv2"]
    w3, b3 = params["conv3"]
    wd3, bd3 = params["deconv3"]
    wd2, bd2 = params["deconv2"]
    wd1, bd1 = params["deconv1"]
    C1, C2, C3 = w1.shape[0], w2.shape[0], w3.shape[0]
    C0p, C1p, C2p, C3p = map(_ceil8, (C0, C1, C2, C3))

    # Exact PyTorch Conv1d / ConvTranspose1d length arithmetic.
    L1 = (L0 - K) // 2 + 1
    L2 = (L1 - K) // 2 + 1
    L3 = L2 - K + 1
    Lp4 = L3 + 2 * K - 2                  # deconv3 padded width (stride 1, outpad 0)
    L4 = Lp4 - K + 1
    Lp5 = 2 * L4 + 2 * K - 2              # deconv2 padded width (stride 2, outpad 1)
    L5 = Lp5 - K + 1
    Lp6 = 2 * L5 + 2 * K - 2              # deconv1 padded width (stride 2, outpad 1)
    L6 = Lp6 - K + 1

    # Batch block: >=2 grid steps (keeps both v7x TCs busy), capped so the
    # O(B^2) selection matrices stay small.
    if batch_block is None:
        B = min(max(1, (N + 1) // 2), 8)
    else:
        B = int(batch_block)
    B = max(1, min(B, N))
    G = -(-N // B)
    Np = G * B

    # ---- pack weights + biases + selection matrices into ONE buffer ----------
    def conv_pack(w, b, Cinp, Coutp):     # (Cout, Cin, K) -> (Coutp, K*Cinp | bias)
        Cout, Cin, _ = w.shape
        wp = jnp.zeros((Coutp, K, Cinp), jnp.float32)
        wp = wp.at[:Cout, :, :Cin].set(jnp.transpose(w.astype(jnp.float32), (0, 2, 1)))
        bp = jnp.zeros((Coutp, 1), jnp.float32).at[:Cout, 0].set(b.astype(jnp.float32))
        return jnp.concatenate([wp.reshape(Coutp, K * Cinp), bp], axis=1)

    def deconv_pack(w, b, Cinp, Coutp):   # ConvTranspose1d weight (Cin, Cout, K)
        w_conv = jnp.transpose(jnp.flip(w, axis=-1), (1, 0, 2))   # (Cout, Cin, K)
        return conv_pack(w_conv, b, Cinp, Coutp)

    # Per-layer column-selection matrices (valid-trim + stride fold; for deconvs the
    # next layer's zero-upsample + K-1 padding is pre-multiplied in -- exact since
    # act(0)=0 and the bias is broadcast over columns).
    sel1 = _sel_conv_np(B, L0, 2, L1, K)
    sel2 = _sel_conv_np(B, L1, 2, L2, K)
    sel3 = _sel_conv_np(B, L2, 1, L3, K)
    u4 = _upsample_np(B, L3, 1, K - 1, Lp4)
    m4 = _sel_conv_np(B, Lp4, 1, L4, K) @ _upsample_np(B, L4, 2, K - 1, Lp5)
    m5 = _sel_conv_np(B, Lp5, 1, L5, K) @ _upsample_np(B, L5, 2, K - 1, Lp6)
    sel6 = _sel_conv_np(B, Lp6, 1, L6, K)

    blocks = [
        ("w1", conv_pack(w1, b1, C0p, C1p)),
        ("w2", conv_pack(w2, b2, C1p, C2p)),
        ("w3", conv_pack(w3, b3, C2p, C3p)),
        ("w4", deconv_pack(wd3, bd3, C3p, C2p)),
        ("w5", deconv_pack(wd2, bd2, C2p, C1p)),
        ("w6", deconv_pack(wd1, bd1, C1p, C0p)),
        ("sel1", jnp.asarray(sel1)), ("sel2", jnp.asarray(sel2)),
        ("sel3", jnp.asarray(sel3)), ("u4", jnp.asarray(u4)),
        ("m4", jnp.asarray(m4)), ("m5", jnp.asarray(m5)),
        ("sel6", jnp.asarray(sel6)),
    ]
    Ccols = max(int(a.shape[1]) for _, a in blocks)
    offs, rows, r = {}, [], 0
    for name, a in blocks:
        nr, nc = int(a.shape[0]), int(a.shape[1])
        offs[name] = (r, nr, nc)
        nr8 = _ceil8(nr)                       # 8-aligned row offsets -> cheap slices
        rows.append(jnp.pad(a, ((0, nr8 - nr), (0, Ccols - nc))))
        r += nr8
    pbuf = jnp.concatenate(rows, axis=0)       # (Rtot, Ccols), ~1 MB at B=4
    Rtot = r

    # ---- input layout: (G, C0p, B*L0), batch stacked along lanes --------------
    xp = x.astype(jnp.float32)
    if Np != N:
        xp = jnp.concatenate([xp, jnp.zeros((Np - N, C0, L0), jnp.float32)], axis=0)
    xp = jnp.pad(xp, ((0, 0), (0, C0p - C0), (0, 0)))
    xp = xp.reshape(G, B, C0p, L0).transpose(0, 2, 1, 3).reshape(G, C0p, B * L0)

    # ---- kernel ---------------------------------------------------------------
    def act(v):
        return jnp.where(v >= 0, v, slope * v)

    def kernel(x_ref, p_ref, y_ref, e_ref):
        def weight(name, cinp):
            r0, nr, _ = offs[name]
            blk = p_ref[r0:r0 + nr, :K * cinp + 1]
            return blk[:, :K * cinp], blk[:, K * cinp:K * cinp + 1]

        def sel(name):
            r0, nr, nc = offs[name]
            return p_ref[r0:r0 + nr, :nc]

        def conv(h, name, cinp):
            # Stride-1 valid conv over the batched (cinp, W) activation: K lane
            # slices stacked on sublanes -> ONE MXU dot, bias fused.
            w, b = weight(name, cinp)
            Wv = h.shape[1] - K + 1
            patch = jnp.concatenate([h[:, k:k + Wv] for k in range(K)], axis=0)
            return jnp.dot(w, patch, preferred_element_type=jnp.float32) + b

        dot = functools.partial(jnp.dot, preferred_element_type=jnp.float32)

        h = x_ref[0]                                        # (C0p, B*L0)
        h = act(dot(conv(h, "w1", C0p), sel("sel1")))       # (C1p, B*L1)
        h = act(dot(conv(h, "w2", C1p), sel("sel2")))       # (C2p, B*L2)
        h = act(dot(conv(h, "w3", C2p), sel("sel3")))       # (C3p, B*L3)
        e_ref[0] = h[:C3]
        h = dot(h, sel("u4"))                               # (C3p, B*Lp4)
        h = act(dot(conv(h, "w4", C3p), sel("m4")))         # (C2p, B*Lp5)
        h = act(dot(conv(h, "w5", C2p), sel("m5")))         # (C1p, B*Lp6)
        h = dot(conv(h, "w6", C1p), sel("sel6"))            # (C0p, B*L6)
        if activations:
            h = pl.reciprocal(1.0 + jnp.exp(-h), approx=True)   # sigmoid
        y_ref[0] = h[:C0]

    y_blk, e_blk = pl.pallas_call(
        kernel,
        out_shape=(jax.ShapeDtypeStruct((G, C0, B * L6), jnp.float32),
                   jax.ShapeDtypeStruct((G, C3, B * L3), jnp.float32)),
        grid=(G,),
        in_specs=[pl.BlockSpec((1, C0p, B * L0), lambda g: (g, 0, 0)),
                  pl.BlockSpec((Rtot, Ccols), lambda g: (0, 0))],
        out_specs=(pl.BlockSpec((1, C0, B * L6), lambda g: (g, 0, 0)),
                   pl.BlockSpec((1, C3, B * L3), lambda g: (g, 0, 0))),
        compiler_params=pltpu.CompilerParams(dimension_semantics=("parallel",)),
    )(xp, pbuf)

    # ---- lane-dense slabs -> (N, C, L) ----------------------------------------
    y = y_blk.reshape(G, C0, B, L6).transpose(0, 2, 1, 3).reshape(Np, C0, L6)[:N]
    extra = e_blk.reshape(G, C3, B, L3).transpose(0, 2, 1, 3).reshape(Np, C3, L3)[:N]
    return y, extra


# ---------------------------------------------------------------------------
# Pure-XLA reference (correctness check only).
# ---------------------------------------------------------------------------
def cae3_reference(params, x, *, kernel_size, leaky=True, neg_slope=0.01,
                   activations=True):
    K = kernel_size
    slope = neg_slope if leaky else 0.0
    dn = ("NCH", "OIH", "NCH")
    act = lambda v: jnp.where(v >= 0, v, slope * v)

    def conv(h, w, b, stride):
        out = jax.lax.conv_general_dilated(
            h, w, window_strides=(stride,), padding="VALID",
            dimension_numbers=dn, precision=jax.lax.Precision.HIGHEST)
        return out + b[None, :, None]

    def deconv(h, w, b, stride, output_padding):
        w_conv = jnp.transpose(jnp.flip(w, axis=-1), (1, 0, 2))
        out = jax.lax.conv_general_dilated(
            h, w_conv, window_strides=(1,),
            padding=[(K - 1, K - 1 + output_padding)],
            lhs_dilation=(stride,), dimension_numbers=dn,
            precision=jax.lax.Precision.HIGHEST)
        return out + b[None, :, None]

    h = act(conv(x, *params["conv1"], 2))
    h = act(conv(h, *params["conv2"], 2))
    h = act(conv(h, *params["conv3"], 1))
    extra = h
    h = act(deconv(h, *params["deconv3"], 1, 0))
    h = act(deconv(h, *params["deconv2"], 2, 1))
    h = deconv(h, *params["deconv1"], 2, 1)
    if activations:
        h = 1.0 / (1.0 + jnp.exp(-h))
    return h, extra


# ---------------------------------------------------------------------------
# Parameter init (PyTorch-default-style uniform bounds).
# ---------------------------------------------------------------------------
def init_cae3_params(key, input_channels, filter_multiplier, kernel_size):
    IC, FM, K = input_channels, filter_multiplier, kernel_size

    def conv_init(k, cin, cout):
        k1, k2 = jax.random.split(k)
        bound = 1.0 / (cin * K) ** 0.5
        return (jax.random.uniform(k1, (cout, cin, K), jnp.float32, -bound, bound),
                jax.random.uniform(k2, (cout,), jnp.float32, -bound, bound))

    def deconv_init(k, cin, cout):
        k1, k2 = jax.random.split(k)
        bound = 1.0 / (cout * K) ** 0.5
        return (jax.random.uniform(k1, (cin, cout, K), jnp.float32, -bound, bound),
                jax.random.uniform(k2, (cout,), jnp.float32, -bound, bound))

    ks = jax.random.split(key, 6)
    return {
        "conv1": conv_init(ks[0], IC, IC * FM),
        "conv2": conv_init(ks[1], IC * FM, IC * FM * 2),
        "conv3": conv_init(ks[2], IC * FM * 2, IC * FM * 4),
        "deconv3": deconv_init(ks[3], IC * FM * 4, IC * FM * 2),
        "deconv2": deconv_init(ks[4], IC * FM * 2, IC * FM),
        "deconv1": deconv_init(ks[5], IC * FM, IC),
    }


if __name__ == "__main__":
    IC, FM, K = 1, 4, 5          # input_channels, filter_multiplier, kernel_size
    N, L = 8, 64                 # batch 8 -> 2 grid steps of 4 lane-stacked samples
    key = jax.random.PRNGKey(0)
    pkey, xkey = jax.random.split(key)
    params = init_cae3_params(pkey, IC, FM, K)
    x = jax.random.normal(xkey, (N, IC, L), jnp.float32)   # NCL, like PyTorch

    fwd = jax.jit(functools.partial(cae3_forward, kernel_size=K))
    y, extra = fwd(params, x)
    jax.block_until_ready((y, extra))

    y_ref, extra_ref = cae3_reference(params, x, kernel_size=K)
    assert y.shape == y_ref.shape == (N, IC, 64)
    assert extra.shape == extra_ref.shape == (N, IC * FM * 4, 9)
    assert jnp.allclose(y, y_ref, rtol=2e-3, atol=2e-3)
    assert jnp.allclose(extra, extra_ref, rtol=2e-3, atol=2e-3)
    print("KERNEL_OK")
</pallas_src>

<mosaic_0001>
module attributes {stable_mosaic.version = 11 : i64} {
  func.func @kernel(%arg0: i32, %arg1: memref<1x8x256xf32, #tpu.memory_space<vmem>>, %arg2: memref<992x272xf32, #tpu.memory_space<vmem>>, %arg3: memref<1x1x256xf32, #tpu.memory_space<vmem>>, %arg4: memref<1x16x36xf32, #tpu.memory_space<vmem>>) attributes {dimension_semantics = [#tpu.dimension_semantics<parallel>], iteration_bounds = array<i64: 2>, scalar_prefetch = 0 : i64, scratch_operands = 0 : i64, tpu.core_type = #tpu.core_type<tc>, window_params = [{transform_indices = @transform_0, window_bounds = array<i64: 1, 8, 256>}, {pipeline_mode = #tpu.pipeline_mode<synchronous>, transform_indices = @transform_1, window_bounds = array<i64: 992, 272>}, {transform_indices = @transform_2, window_bounds = array<i64: 1, 1, 256>}, {transform_indices = @transform_3, window_bounds = array<i64: 1, 16, 36>}]} {
    %c0 = arith.constant 0 : index
    %c0_0 = arith.constant 0 : index
    %c0_1 = arith.constant 0 : index
    %0 = vector.load %arg1[%c0, %c0_0, %c0_1] : memref<1x8x256xf32, #tpu.memory_space<vmem>>, vector<1x8x256xf32>
    %1 = vector.shape_cast %0 : vector<1x8x256xf32> to vector<8x256xf32>
    %c0_2 = arith.constant 0 : index
    %c0_3 = arith.constant 0 : index
    %2 = vector.load %arg2[%c0_2, %c0_3] : memref<992x272xf32, #tpu.memory_space<vmem>>, vector<8x41xf32>
    %3 = vector.extract_strided_slice %2 {offsets = [0, 0], sizes = [8, 40], strides = [1, 1]} : vector<8x41xf32> to vector<8x40xf32>
    %4 = vector.extract_strided_slice %2 {offsets = [0, 40], sizes = [8, 1], strides = [1, 1]} : vector<8x41xf32> to vector<8x1xf32>
    %5 = vector.extract_strided_slice %1 {offsets = [0, 0], sizes = [8, 252], strides = [1, 1]} : vector<8x256xf32> to vector<8x252xf32>
    %6 = vector.extract_strided_slice %1 {offsets = [0, 1], sizes = [8, 252], strides = [1, 1]} : vector<8x256xf32> to vector<8x252xf32>
    %7 = vector.extract_strided_slice %1 {offsets = [0, 2], sizes = [8, 252], strides = [1, 1]} : vector<8x256xf32> to vector<8x252xf32>
    %8 = vector.extract_strided_slice %1 {offsets = [0, 3], sizes = [8, 252], strides = [1, 1]} : vector<8x256xf32> to vector<8x252xf32>
    %9 = vector.extract_strided_slice %1 {offsets = [0, 4], sizes = [8, 252], strides = [1, 1]} : vector<8x256xf32> to vector<8x252xf32>
    %10 = tpu.concatenate %5, %6, %7, %8, %9 in 0 : vector<8x252xf32>, vector<8x252xf32>, vector<8x252xf32>, vector<8x252xf32>, vector<8x252xf32> -> vector<40x252xf32>
    %cst = arith.constant dense<0.000000e+00> : vector<8x252xf32>
    %11 = tpu.matmul %3, %10, %cst {dimension_numbers = #tpu.dot_dimension_numbers<[1], [0], [0], [1], [0, 0, 1, 1], [], []>} : vector<8x40xf32>, vector<40x252xf32>, vector<8x252xf32> -> vector<8x252xf32>
    %12 = vector.broadcast %4 : vector<8x1xf32> to vector<8x252xf32>
    %13 = arith.addf %11, %12 : vector<8x252xf32>
    %c56 = arith.constant 56 : index
    %c0_4 = arith.constant 0 : index
    %14 = vector.load %arg2[%c56, %c0_4] : memref<992x272xf32, #tpu.memory_space<vmem>>, vector<252x120xf32>
    %cst_5 = arith.constant dense<0.000000e+00> : vector<8x120xf32>
    %15 = tpu.matmul %13, %14, %cst_5 {dimension_numbers = #tpu.dot_dimension_numbers<[1], [0], [0], [1], [0, 0, 1, 1], [], []>} : vector<8x252xf32>, vector<252x120xf32>, vector<8x120xf32> -> vector<8x120xf32>
    %cst_6 = arith.constant 0.000000e+00 : f32
    %16 = vector.broadcast %cst_6 : f32 to vector<8x120xf32>
    %17 = arith.cmpf oge, %15, %16 : vector<8x120xf32>
    %cst_7 = arith.constant 0.00999999977 : f32
    %18 = vector.broadcast %cst_7 : f32 to vector<8x120xf32>
    %19 = arith.mulf %18, %15 : vector<8x120xf32>
    %20 = arith.select %17, %15, %19 : vector<8x120xi1>, vector<8x120xf32>
    %c8 = arith.constant 8 : index
    %c0_8 = arith.constant 0 : index
    %21 = vector.load %arg2[%c8, %c0_8] : memref<992x272xf32, #tpu.memory_space<vmem>>, vector<8x41xf32>
    %22 = vector.extract_strided_slice %21 {offsets = [0, 0], sizes = [8, 40], strides = [1, 1]} : vector<8x41xf32> to vector<8x40xf32>
    %23 = vector.extract_strided_slice %21 {offsets = [0, 40], sizes = [8, 1], strides = [1, 1]} : vector<8x41xf32> to vector<8x1xf32>
    %24 = vector.extract_strided_slice %20 {offsets = [0, 0], sizes = [8, 116], strides = [1, 1]} : vector<8x120xf32> to vector<8x116xf32>
    %25 = vector.extract_strided_slice %20 {offsets = [0, 1], sizes = [8, 116], strides = [1, 1]} : vector<8x120xf32> to vector<8x116xf32>
    %26 = vector.extract_strided_slice %20 {offsets = [0, 2], sizes = [8, 116], strides = [1, 1]} : vector<8x120xf32> to vector<8x116xf32>
    %27 = vector.extract_strided_slice %20 {offsets = [0, 3], sizes = [8, 116], strides = [1, 1]} : vector<8x120xf32> to vector<8x116xf32>
    %28 = vector.extract_strided_slice %20 {offsets = [0, 4], sizes = [8, 116], strides = [1, 1]} : vector<8x120xf32> to vector<8x116xf32>
    %29 = tpu.concatenate %24, %25, %26, %27, %28 in 0 : vector<8x116xf32>, vector<8x116xf32>, vector<8x116xf32>, vector<8x116xf32>, vector<8x116xf32> -> vector<40x116xf32>
    %cst_9 = arith.constant dense<0.000000e+00> : vector<8x116xf32>
    %30 = tpu.matmul %22, %29, %cst_9 {dimension_numbers = #tpu.dot_dimension_numbers<[1], [0], [0], [1], [0, 0, 1, 1], [], []>} : vector<8x40xf32>, vector<40x116xf32>, vector<8x116xf32> -> vector<8x116xf32>
    %31 = vector.broadcast %23 : vector<8x1xf32> to vector<8x116xf32>
    %32 = arith.addf %30, %31 : vector<8x116xf32>
    %c312 = arith.constant 312 : index
    %c0_10 = arith.constant 0 : index
    %33 = vector.load %arg2[%c312, %c0_10] : memref<992x272xf32, #tpu.memory_space<vmem>>, vector<116x52xf32>
    %cst_11 = arith.constant dense<0.000000e+00> : vector<8x52xf32>
    %34 = tpu.matmul %32, %33, %cst_11 {dimension_numbers = #tpu.dot_dimension_numbers<[1], [0], [0], [1], [0, 0, 1, 1], [], []>} : vector<8x116xf32>, vector<116x52xf32>, vector<8x52xf32> -> vector<8x52xf32>
    %cst_12 = arith.constant 0.000000e+00 : f32
    %35 = vector.broadcast %cst_12 : f32 to vector<8x52xf32>
    %36 = arith.cmpf oge, %34, %35 : vector<8x52xf32>
    %cst_13 = arith.constant 0.00999999977 : f32
    %37 = vector.broadcast %cst_13 : f32 to vector<8x52xf32>
    %38 = arith.mulf %37, %34 : vector<8x52xf32>
    %39 = arith.select %36, %34, %38 : vector<8x52xi1>, vector<8x52xf32>
    %c16 = arith.constant 16 : index
    %c0_14 = arith.constant 0 : index
    %40 = vector.load %arg2[%c16, %c0_14] : memref<992x272xf32, #tpu.memory_space<vmem>>, vector<16x41xf32>
    %41 = vector.extract_strided_slice %40 {offsets = [0, 0], sizes = [16, 40], strides = [1, 1]} : vector<16x41xf32> to vector<16x40xf32>
    %42 = vector.extract_strided_slice %40 {offsets = [0, 40], sizes = [16, 1], strides = [1, 1]} : vector<16x41xf32> to vector<16x1xf32>
    %43 = vector.extract_strided_slice %39 {offsets = [0, 0], sizes = [8, 48], strides = [1, 1]} : vector<8x52xf32> to vector<8x48xf32>
    %44 = vector.extract_strided_slice %39 {offsets = [0, 1], sizes = [8, 48], strides = [1, 1]} : vector<8x52xf32> to vector<8x48xf32>
    %45 = vector.extract_strided_slice %39 {offsets = [0, 2], sizes = [8, 48], strides = [1, 1]} : vector<8x52xf32> to vector<8x48xf32>
    %46 = vector.extract_strided_slice %39 {offsets = [0, 3], sizes = [8, 48], strides = [1, 1]} : vector<8x52xf32> to vector<8x48xf32>
    %47 = vector.extract_strided_slice %39 {offsets = [0, 4], sizes = [8, 48], strides = [1, 1]} : vector<8x52xf32> to vector<8x48xf32>
    %48 = tpu.concatenate %43, %44, %45, %46, %47 in 0 : vector<8x48xf32>, vector<8x48xf32>, vector<8x48xf32>, vector<8x48xf32>, vector<8x48xf32> -> vector<40x48xf32>
    %cst_15 = arith.constant dense<0.000000e+00> : vector<16x48xf32>
    %49 = tpu.matmul %41, %48, %cst_15 {dimension_numbers = #tpu.dot_dimension_numbers<[1], [0], [0], [1], [0, 0, 1, 1], [], []>} : vector<16x40xf32>, vector<40x48xf32>, vector<16x48xf32> -> vector<16x48xf32>
    %50 = vector.broadcast %42 : vector<16x1xf32> to vector<16x48xf32>
    %51 = arith.addf %49, %50 : vector<16x48xf32>
    %c432 = arith.constant 432 : index
    %c0_16 = arith.constant 0 : index
    %52 = vector.load %arg2[%c432, %c0_16] : memref<992x272xf32, #tpu.memory_space<vmem>>, vector<48x36xf32>
    %cst_17 = arith.constant dense<0.000000e+00> : vector<16x36xf32>
    %53 = tpu.matmul %51, %52, %cst_17 {dimension_numbers = #tpu.dot_dimension_numbers<[1], [0], [0], [1], [0, 0, 1, 1], [], []>} : vector<16x48xf32>, vector<48x36xf32>, vector<16x36xf32> -> vector<16x36xf32>
    %cst_18 = arith.constant 0.000000e+00 : f32
    %54 = vector.broadcast %cst_18 : f32 to vector<16x36xf32>
    %55 = arith.cmpf oge, %53, %54 : vector<16x36xf32>
    %cst_19 = arith.constant 0.00999999977 : f32
    %56 = vector.broadcast %cst_19 : f32 to vector<16x36xf32>
    %57 = arith.mulf %56, %53 : vector<16x36xf32>
    %58 = arith.select %55, %53, %57 : vector<16x36xi1>, vector<16x36xf32>
    %c0_20 = arith.constant 0 : index
    %c0_21 = arith.constant 0 : index
    %c0_22 = arith.constant 0 : index
    %59 = vector.load %arg4[%c0_20, %c0_21, %c0_22] : memref<1x16x36xf32, #tpu.memory_space<vmem>>, vector<1x16x36xf32>
    %60 = vector.shape_cast %59 : vector<1x16x36xf32> to vector<16x36xf32>
    %61 = vector.shape_cast %58 : vector<16x36xf32> to vector<1x16x36xf32>
    tpu.vector_store %arg4[%c0_20, %c0_21, %c0_22], %61 {strides = array<i32>} : memref<1x16x36xf32, #tpu.memory_space<vmem>>, vector<1x16x36xf32>,
    %c480 = arith.constant 480 : index
    %c0_23 = arith.constant 0 : index
    %62 = vector.load %arg2[%c480, %c0_23] : memref<992x272xf32, #tpu.memory_space<vmem>>, vector<36x68xf32>
    %cst_24 = arith.constant dense<0.000000e+00> : vector<16x68xf32>
    %63 = tpu.matmul %58, %62, %cst_24 {dimension_numbers = #tpu.dot_dimension_numbers<[1], [0], [0], [1], [0, 0, 1, 1], [], []>} : vector<16x36xf32>, vector<36x68xf32>, vector<16x68xf32> -> vector<16x68xf32>
    %c32 = arith.constant 32 : index
    %c0_25 = arith.constant 0 : index
    %64 = vector.load %arg2[%c32, %c0_25] : memref<992x272xf32, #tpu.memory_space<vmem>>, vector<8x81xf32>
    %65 = vector.extract_strided_slice %64 {offsets = [0, 0], sizes = [8, 80], strides = [1, 1]} : vector<8x81xf32> to vector<8x80xf32>
    %66 = vector.extract_strided_slice %64 {offsets = [0, 80], sizes = [8, 1], strides = [1, 1]} : vector<8x81xf32> to vector<8x1xf32>
    %67 = vector.extract_strided_slice %63 {offsets = [0, 0], sizes = [16, 64], strides = [1, 1]} : vector<16x68xf32> to vector<16x64xf32>
    %68 = vector.extract_strided_slice %63 {offsets = [0, 1], sizes = [16, 64], strides = [1, 1]} : vector<16x68xf32> to vector<16x64xf32>
    %69 = vector.extract_strided_slice %63 {offsets = [0, 2], sizes = [16, 64], strides = [1, 1]} : vector<16x68xf32> to vector<16x64xf32>
    %70 = vector.extract_strided_slice %63 {offsets = [0, 3], sizes = [16, 64], strides = [1, 1]} : vector<16x68xf32> to vector<16x64xf32>
    %71 = vector.extract_strided_slice %63 {offsets = [0, 4], sizes = [16, 64], strides = [1, 1]} : vector<16x68xf32> to vector<16x64xf32>
    %72 = tpu.concatenate %67, %68, %69, %70, %71 in 0 : vector<16x64xf32>, vector<16x64xf32>, vector<16x64xf32>, vector<16x64xf32>, vector<16x64xf32> -> vector<80x64xf32>
    %cst_26 = arith.constant dense<0.000000e+00> : vector<8x64xf32>
    %73 = tpu.matmul %65, %72, %cst_26 {dimension_numbers = #tpu.dot_dimension_numbers<[1], [0], [0], [1], [0, 0, 1, 1], [], []>} : vector<8x80xf32>, vector<80x64xf32>, vector<8x64xf32> -> vector<8x64xf32>
    %74 = vector.broadcast %66 : vector<8x1xf32> to vector<8x64xf32>
    %75 = arith.addf %73, %74 : vector<8x64xf32>
    %c520 = arith.constant 520 : index
    %c0_27 = arith.constant 0 : index
    %76 = vector.load %arg2[%c520, %c0_27] : memref<992x272xf32, #tpu.memory_space<vmem>>, vector<64x136xf32>
    %cst_28 = arith.constant dense<0.000000e+00> : vector<8x136xf32>
    %77 = tpu.matmul %75, %76, %cst_28 {dimension_numbers = #tpu.dot_dimension_numbers<[1], [0], [0], [1], [0, 0, 1, 1], [], []>} : vector<8x64xf32>, vector<64x136xf32>, vector<8x136xf32> -> vector<8x136xf32>
    %cst_29 = arith.constant 0.000000e+00 : f32
    %78 = vector.broadcast %cst_29 : f32 to vector<8x136xf32>
    %79 = arith.cmpf oge, %77, %78 : vector<8x136xf32>
    %cst_30 = arith.constant 0.00999999977 : f32
    %80 = vector.broadcast %cst_30 : f32 to vector<8x136xf32>
    %81 = arith.mulf %80, %77 : vector<8x136xf32>
    %82 = arith.select %79, %77, %81 : vector<8x136xi1>, vector<8x136xf32>
    %c40 = arith.constant 40 : index
    %c0_31 = arith.constant 0 : index
    %83 = vector.load %arg2[%c40, %c0_31] : memref<992x272xf32, #tpu.memory_space<vmem>>, vector<8x41xf32>
    %84 = vector.extract_strided_slice %83 {offsets = [0, 0], sizes = [8, 40], strides = [1, 1]} : vector<8x41xf32> to vector<8x40xf32>
    %85 = vector.extract_strided_slice %83 {offsets = [0, 40], sizes = [8, 1], strides = [1, 1]} : vector<8x41xf32> to vector<8x1xf32>
    %86 = vector.extract_strided_slice %82 {offsets = [0, 0], sizes = [8, 132], strides = [1, 1]} : vector<8x136xf32> to vector<8x132xf32>
    %87 = vector.extract_strided_slice %82 {offsets = [0, 1], sizes = [8, 132], strides = [1, 1]} : vector<8x136xf32> to vector<8x132xf32>
    %88 = vector.extract_strided_slice %82 {offsets = [0, 2], sizes = [8, 132], strides = [1, 1]} : vector<8x136xf32> to vector<8x132xf32>
    %89 = vector.extract_strided_slice %82 {offsets = [0, 3], sizes = [8, 132], strides = [1, 1]} : vector<8x136xf32> to vector<8x132xf32>
    %90 = vector.extract_strided_slice %82 {offsets = [0, 4], sizes = [8, 132], strides = [1, 1]} : vector<8x136xf32> to vector<8x132xf32>
    %91 = tpu.concatenate %86, %87, %88, %89, %90 in 0 : vector<8x132xf32>, vector<8x132xf32>, vector<8x132xf32>, vector<8x132xf32>, vector<8x132xf32> -> vector<40x132xf32>
    %cst_32 = arith.constant dense<0.000000e+00> : vector<8x132xf32>
    %92 = tpu.matmul %84, %91, %cst_32 {dimension_numbers = #tpu.dot_dimension_numbers<[1], [0], [0], [1], [0, 0, 1, 1], [], []>} : vector<8x40xf32>, vector<40x132xf32>, vector<8x132xf32> -> vector<8x132xf32>
    %93 = vector.broadcast %85 : vector<8x1xf32> to vector<8x132xf32>
    %94 = arith.addf %92, %93 : vector<8x132xf32>
    %c584 = arith.constant 584 : index
    %c0_33 = arith.constant 0 : index
    %95 = vector.load %arg2[%c584, %c0_33] : memref<992x272xf32, #tpu.memory_space<vmem>>, vector<132x272xf32>
    %cst_34 = arith.constant dense<0.000000e+00> : vector<8x272xf32>
    %96 = tpu.matmul %94, %95, %cst_34 {dimension_numbers = #tpu.dot_dimension_numbers<[1], [0], [0], [1], [0, 0, 1, 1], [], []>} : vector<8x132xf32>, vector<132x272xf32>, vector<8x272xf32> -> vector<8x272xf32>
    %cst_35 = arith.constant 0.000000e+00 : f32
    %97 = vector.broadcast %cst_35 : f32 to vector<8x272xf32>
    %98 = arith.cmpf oge, %96, %97 : vector<8x272xf32>
    %cst_36 = arith.constant 0.00999999977 : f32
    %99 = vector.broadcast %cst_36 : f32 to vector<8x272xf32>
    %100 = arith.mulf %99, %96 : vector<8x272xf32>
    %101 = arith.select %98, %96, %100 : vector<8x272xi1>, vector<8x272xf32>
    %c48 = arith.constant 48 : index
    %c0_37 = arith.constant 0 : index
    %102 = vector.load %arg2[%c48, %c0_37] : memref<992x272xf32, #tpu.memory_space<vmem>>, vector<8x41xf32>
    %103 = vector.extract_strided_slice %102 {offsets = [0, 0], sizes = [8, 40], strides = [1, 1]} : vector<8x41xf32> to vector<8x40xf32>
    %104 = vector.extract_strided_slice %102 {offsets = [0, 40], sizes = [8, 1], strides = [1, 1]} : vector<8x41xf32> to vector<8x1xf32>
    %105 = vector.extract_strided_slice %101 {offsets = [0, 0], sizes = [8, 268], strides = [1, 1]} : vector<8x272xf32> to vector<8x268xf32>
    %106 = vector.extract_strided_slice %101 {offsets = [0, 1], sizes = [8, 268], strides = [1, 1]} : vector<8x272xf32> to vector<8x268xf32>
    %107 = vector.extract_strided_slice %101 {offsets = [0, 2], sizes = [8, 268], strides = [1, 1]} : vector<8x272xf32> to vector<8x268xf32>
    %108 = vector.extract_strided_slice %101 {offsets = [0, 3], sizes = [8, 268], strides = [1, 1]} : vector<8x272xf32> to vector<8x268xf32>
    %109 = vector.extract_strided_slice %101 {offsets = [0, 4], sizes = [8, 268], strides = [1, 1]} : vector<8x272xf32> to vector<8x268xf32>
    %110 = tpu.concatenate %105, %106, %107, %108, %109 in 0 : vector<8x268xf32>, vector<8x268xf32>, vector<8x268xf32>, vector<8x268xf32>, vector<8x268xf32> -> vector<40x268xf32>
    %cst_38 = arith.constant dense<0.000000e+00> : vector<8x268xf32>
    %111 = tpu.matmul %103, %110, %cst_38 {dimension_numbers = #tpu.dot_dimension_numbers<[1], [0], [0], [1], [0, 0, 1, 1], [], []>} : vector<8x40xf32>, vector<40x268xf32>, vector<8x268xf32> -> vector<8x268xf32>
    %112 = vector.broadcast %104 : vector<8x1xf32> to vector<8x268xf32>
    %113 = arith.addf %111, %112 : vector<8x268xf32>
    %c720 = arith.constant 720 : index
    %c0_39 = arith.constant 0 : index
    %114 = vector.load %arg2[%c720, %c0_39] : memref<992x272xf32, #tpu.memory_space<vmem>>, vector<268x256xf32>
    %cst_40 = arith.constant dense<0.000000e+00> : vector<8x256xf32>
    %115 = tpu.matmul %113, %114, %cst_40 {dimension_numbers = #tpu.dot_dimension_numbers<[1], [0], [0], [1], [0, 0, 1, 1], [], []>} : vector<8x268xf32>, vector<268x256xf32>, vector<8x256xf32> -> vector<8x256xf32>
    %cst_41 = arith.constant 0.000000e+00 : f32
    %116 = vector.broadcast %cst_41 : f32 to vector<8x256xf32>
    %117 = arith.subf %116, %115 : vector<8x256xf32>
    %118 = math.exp %117 : vector<8x256xf32>
    %cst_42 = arith.constant 1.000000e+00 : f32
    %119 = vector.broadcast %cst_42 : f32 to vector<8x256xf32>
    %120 = arith.addf %119, %118 : vector<8x256xf32>
    %121 = tpu.reciprocal %120 {approx = true} : vector<8x256xf32> -> vector<8x256xf32>
    %122 = vector.extract_strided_slice %121 {offsets = [0, 0], sizes = [1, 256], strides = [1, 1]} : vector<8x256xf32> to vector<1x256xf32>
    %c0_43 = arith.constant 0 : index
    %c0_44 = arith.constant 0 : index
    %c0_45 = arith.constant 0 : index
    %123 = vector.load %arg3[%c0_43, %c0_44, %c0_45] : memref<1x1x256xf32, #tpu.memory_space<vmem>>, vector<1x1x256xf32>
    %124 = vector.shape_cast %123 : vector<1x1x256xf32> to vector<1x256xf32>
    %125 = vector.shape_cast %122 : vector<1x256xf32> to vector<1x1x256xf32>
    tpu.vector_store %arg3[%c0_43, %c0_44, %c0_45], %125 {strides = array<i32>} : memref<1x1x256xf32, #tpu.memory_space<vmem>>, vector<1x1x256xf32>,
    return
  }
  func.func @transform_0(%arg0: i32) -> (i32, i32, i32) {
    %c0_i32 = arith.constant 0 : i32
    %c0_i32_0 = arith.constant 0 : i32
    %c0_i32_1 = arith.constant 0 : i32
    return %arg0, %c0_i32, %c0_i32_0 : i32, i32, i32
  }
  func.func @transform_1(%arg0: i32) -> (i32, i32) {
    %c0_i32 = arith.constant 0 : i32
    %c0_i32_0 = arith.constant 0 : i32
    %c0_i32_1 = arith.constant 0 : i32
    return %c0_i32, %c0_i32_0 : i32, i32
  }
  func.func @transform_2(%arg0: i32) -> (i32, i32, i32) {
    %c0_i32 = arith.constant 0 : i32
    %c0_i32_0 = arith.constant 0 : i32
    %c0_i32_1 = arith.constant 0 : i32
    return %arg0, %c0_i32, %c0_i32_0 : i32, i32, i32
  }
  func.func @transform_3(%arg0: i32) -> (i32, i32, i32) {
    %c0_i32 = arith.constant 0 : i32
    %c0_i32_0 = arith.constant 0 : i32
    %c0_i32_1 = arith.constant 0 : i32
    return %arg0, %c0_i32, %c0_i32_0 : i32, i32, i32
  }
}

</mosaic_0001>

<llo_original>
// kernel: cae3_forward.1
$region0: #{cae3_forward.1}
  #allocation0 [shape = 'u32[]', space=smem, size = 0x4, offset = 0x4, fixed_abs, tag = 'smem constant byte address 0x4 - core index']
  #allocation1 [shape = 'u32[144,128]{1,0:T(1,128)}', space=vmem, size = 0x12000, scoped, tag = 'internal scratch']
  %s0 = inlined_call_operand.vmem [shape: f32[2,8,256], index: 0, kind: input, shape index: {}]
  %s1 = inlined_call_operand.vmem [shape: f32[992,272], index: 1, kind: input, shape index: {}]
  %s2 = inlined_call_operand.vmem [shape: f32[2,1,256], index: 2, kind: output, shape index: {0}]
  %s3 = inlined_call_operand.vmem [shape: f32[2,16,36], index: 3, kind: output, shape index: {1}]
  %4 = xla_tuple %s2, %s3
  %s5 = sld [smem:[#allocation0]]
  $region49: #{cae3_forward.1} parent=0
    _
  %s7 = ssub.s32 1, %s5
  %s8 = scalar_select 0, %s7, %s5
  loop: start=0, step=1, limit=4
  $region2: #{cae3_forward.1} parent=0 // loop_pre_header
    _
  $region3: #{cae3_forward.1} parent=0 // loop_header
    %s10 = sphi 0, %s14
    %p11 = scmp.ge.s32.totalorder %s10, 4
    %s20 = sphi 0, %s22
    %s23 = sphi 0, %s20
    %s24 = sphi 0, %s23
    %s40 = sphi 0, %s24
    %s44 = sphi 0, %s44
    %s46 = sphi 0, %s44
    %s47 = sphi 0, %s46
    %s61 = sphi 0, %s47
    %s67 = sphi 0, %s69
    %s70 = sphi 0, %s67
    %s71 = sphi 0, %s70
    %s87 = sphi 0, %s71
    %s93 = sphi 0, %s95
    %s96 = sphi 0, %s93
    %s97 = sphi 0, %s96
    %s113 = sphi 0, %s97
  $region4: #{cae3_forward.1} parent=0 // loop_header_branch
    %13 = sbr.rel (%p11) target = $region8
  $region5: #{cae3_forward.1} parent=0 // loop_body
    %s15 = ssub.s32 %s10, 1
    %s16 = ssub.s32 %s10, 2
    %s17 = sadd.s32 %s10, 1
    %s18 = ssub.s32 %s10, %s17
    %p19 = scmp.eq.s32.totalorder %s18, 0
    %s21 = sadd.s32 %s20, 1
    %s22 = scalar_select %p19, %s20, %s21
    %p25 = pneg %p19
    %p26 = scmp.eq.s32.totalorder %s10, 1
    %p27 = por %p25, %p26
    %p28 = scmp.ne.s32.totalorder %s20, %s23
    %p29 = scmp.eq.s32.totalorder %s10, 0
    %p30 = por %p28, %p29
    %p31 = scmp.ne.s32.totalorder %s20, %s23
    %p32 = scmp.eq.s32.totalorder %s15, 1
    %p33 = por %p31, %p32
    %p34 = scmp.ne.s32.totalorder %s23, %s24
    %p35 = scmp.eq.s32.totalorder %s15, 0
    %p36 = por %p34, %p35
    %p37 = scmp.ne.s32.totalorder %s23, %s24
    %p38 = scmp.eq.s32.totalorder %s16, 1
    %p39 = por %p37, %p38
    %p41 = scmp.ne.s32.totalorder %s24, %s40
    %p42 = scmp.eq.s32.totalorder %s16, 0
    %p43 = por %p41, %p42
    %s45 = sadd.s32 %s44, 1
    %p48 = scmp.eq.s32.totalorder %s10, 1
    %p49 = scmp.ne.s32.totalorder %s44, %s46
    %p50 = scmp.eq.s32.totalorder %s10, 0
    %p51 = por %p49, %p50
    %p52 = scmp.ne.s32.totalorder %s44, %s46
    %p53 = scmp.eq.s32.totalorder %s15, 1
    %p54 = por %p52, %p53
    %p55 = scmp.ne.s32.totalorder %s46, %s47
    %p56 = scmp.eq.s32.totalorder %s15, 0
    %p57 = por %p55, %p56
    %p58 = scmp.ne.s32.totalorder %s46, %s47
    %p59 = scmp.eq.s32.totalorder %s16, 1
    %p60 = por %p58, %p59
    %p62 = scmp.ne.s32.totalorder %s47, %s61
    %p63 = scmp.eq.s32.totalorder %s16, 0
    %p64 = por %p62, %p63
    %s65 = ssub.s32 %s10, %s17
    %p66 = scmp.eq.s32.totalorder %s65, 0
    %s68 = sadd.s32 %s67, 1
    %s69 = scalar_select %p66, %s67, %s68
    %p72 = pneg %p66
    %p73 = scmp.eq.s32.totalorder %s10, 1
    %p74 = por %p72, %p73
    %p75 = scmp.ne.s32.totalorder %s67, %s70
    %p76 = scmp.eq.s32.totalorder %s10, 0
    %p77 = por %p75, %p76
    %p78 = scmp.ne.s32.totalorder %s67, %s70
    %p79 = scmp.eq.s32.totalorder %s15, 1
    %p80 = por %p78, %p79
    %p81 = scmp.ne.s32.totalorder %s70, %s71
    %p82 = scmp.eq.s32.totalorder %s15, 0
    %p83 = por %p81, %p82
    %p84 = scmp.ne.s32.totalorder %s70, %s71
    %p85 = scmp.eq.s32.totalorder %s16, 1
    %p86 = por %p84, %p85
    %p88 = scmp.ne.s32.totalorder %s71, %s87
    %p89 = scmp.eq.s32.totalorder %s16, 0
    %p90 = por %p88, %p89
    %s91 = ssub.s32 %s10, %s17
    %p92 = scmp.eq.s32.totalorder %s91, 0
    %s94 = sadd.s32 %s93, 1
    %s95 = scalar_select %p92, %s93, %s94
    %p98 = pneg %p92
    %p99 = scmp.eq.s32.totalorder %s10, 1
    %p100 = por %p98, %p99
    %p101 = scmp.ne.s32.totalorder %s93, %s96
    %p102 = scmp.eq.s32.totalorder %s10, 0
    %p103 = por %p101, %p102
    %p104 = scmp.ne.s32.totalorder %s93, %s96
    %p105 = scmp.eq.s32.totalorder %s15, 1
    %p106 = por %p104, %p105
    %p107 = scmp.ne.s32.totalorder %s96, %s97
    %p108 = scmp.eq.s32.totalorder %s15, 0
    %p109 = por %p107, %p108
    %p110 = scmp.ne.s32.totalorder %s96, %s97
    %p111 = scmp.eq.s32.totalorder %s16, 1
    %p112 = por %p110, %p111
    %p114 = scmp.ne.s32.totalorder %s97, %s113
    %p115 = scmp.eq.s32.totalorder %s16, 0
    %p116 = por %p114, %p115
    %p117 = scmp.le.s32.totalorder 1, %s10
    %p118 = scmp.lt.s32.totalorder %s10, 3
    %p119 = pnand %p117, %p118
    %p120 = pneg %p119
    // Predicated region
    $region9: #{cae3_forward.1} parent=5 // pred_check
      _
    $region10: #{cae3_forward.1} parent=5 // pred_check_branch
      %122 = sbr.rel (%p119) target = $region12
    $region11: #{cae3_forward.1} parent=5 // pred_region
      %s123 = ssub.s32 %s10, 1
      // Predicated region
      $region13: #{cae3_forward.1} parent=11 // pred_check
        %p124 = pneg %p57
      $region14: #{cae3_forward.1} parent=11 // pred_check_branch
        %126 = sbr.rel (%p124) target = $region16
      $region15: #{cae3_forward.1} parent=11 // pred_region
        _
      $region16: #{cae3_forward.1} parent=11 // pred_fallthru
        _
    $region12: #{cae3_forward.1} parent=5 // pred_fallthru
      _
    %p127 = scmp.lt.s32.totalorder %s10, 2
    // Predicated region
    $region17: #{cae3_forward.1} parent=5 // pred_check
      %p128 = pneg %p127
    $region18: #{cae3_forward.1} parent=5 // pred_check_branch
      %130 = sbr.rel (%p128) target = $region20
    $region19: #{cae3_forward.1} parent=5 // pred_region
      // Predicated region
      $region21: #{cae3_forward.1} parent=19 // pred_check
        %p131 = pneg %p30
      $region22: #{cae3_forward.1} parent=19 // pred_check_branch
        %133 = sbr.rel (%p131) target = $region24
      $region23: #{cae3_forward.1} parent=19 // pred_region
        %p134 = scmp.lt.s32.totalorder %s10, 1
        %s135 = scalar_select %p134, %s10, 1
        %s136 = smul.addr %s135, 2
        %s137 = smul.addr %s136, 8
        %s138 = scalar_lea.vmem %s0, %s137
      $region24: #{cae3_forward.1} parent=19 // pred_fallthru
        _
    $region20: #{cae3_forward.1} parent=5 // pred_fallthru
      _
    %p139 = scmp.le.s32.totalorder 1, %s10
    %p140 = scmp.lt.s32.totalorder %s10, 3
    %p141 = pnand %p139, %p140
    %p142 = pneg %p141
    // Predicated region
    $region25: #{cae3_forward.1} parent=5 // pred_check
      _
    $region26: #{cae3_forward.1} parent=5 // pred_check_branch
      %144 = sbr.rel (%p141) target = $region28
    $region27: #{cae3_forward.1} parent=5 // pred_region
      %s145 = ssub.s32 %s10, 1
      %p146 = scmp.lt.s32.totalorder %s15, 1
      %s147 = scalar_select %p146, %s15, 1
      %s148 = smul.addr %s147, 2
      %s149 = smul.addr %s148, 8
      %s150 = scalar_lea.vmem %s0, %s149
      %p151 = pneg %p36
      %p152 = pneg %p33
      %p153 = pneg %p57
      %p154 = pneg %p54
      %p155 = pneg %p83
      %p156 = pneg %p80
      %p157 = scmp.lt.s32.totalorder %s15, 1
      %s158 = scalar_select %p157, %s15, 1
      %s159 = smul.addr %s158, 2
      %s160 = scalar_lea.vmem %s2, %s159
      %p161 = pneg %p109
      %p162 = pneg %p106
      %p163 = scmp.lt.s32.totalorder %s15, 1
      %s164 = scalar_select %p163, %s15, 1
      %s165 = smul.addr %s164, 2
      %s166 = smul.addr %s165, 8
      %s167 = scalar_lea.vmem %s3, %s166
      %p168 = scmp.lt.s32.totalorder %s15, 1
      %s169 = scalar_select %p168, %s15, 1
      %s170 = smul.addr %s169, 2
      %s171 = smul.addr %s170, 8
      %s172 = scalar_lea.vmem %s0, %s171
      %p173 = scmp.lt.s32.totalorder %s15, 1
      %s174 = scalar_select %p173, %s15, 1
      %s175 = smul.addr %s174, 2
      %s176 = scalar_lea.vmem %s2, %s175
      %p177 = scmp.lt.s32.totalorder %s15, 1
      %s178 = scalar_select %p177, %s15, 1
      %s179 = smul.addr %s178, 2
      %s180 = smul.addr %s179, 8
      %s181 = scalar_lea.vmem %s3, %s180
      %v182 = vld [vmem:[%s172] sm:$0xff]
      %v183 = vld [vmem:[%s172 + $0x8] sm:$0xff]
      %v184 = vld [vmem:[%s1] sm:$0xff]
      %187 = vrot.lane.b32.xlu0 %v182, 127
      %v188 = vpop.permute.xlu0 %187
      %189 = vrot.lane.b32.xlu0 %v183, 127
      %v190 = vpop.permute.xlu0 %189
      %vm191 = vcmask 1039360
      %v192 = vsel %vm191, %v188, %v190
      %195 = vrot.lane.b32.xlu0 %v182, 126
      %v196 = vpop.permute.xlu0 %195
      %197 = vrot.lane.b32.xlu0 %v183, 126
      %v198 = vpop.permute.xlu0 %197
      %vm199 = vcmask 1031168
      %v200 = vsel %vm199, %v196, %v198
      %203 = vrot.lane.b32.xlu0 %v182, 125
      %v204 = vpop.permute.xlu0 %203
      %205 = vrot.lane.b32.xlu0 %v183, 125
      %v206 = vpop.permute.xlu0 %205
      %vm207 = vcmask 1022976
      %v208 = vsel %vm207, %v204, %v206
      %211 = vrot.lane.b32.xlu0 %v182, 124
      %v212 = vpop.permute.xlu0 %211
      %213 = vrot.lane.b32.xlu0 %v183, 124
      %v214 = vpop.permute.xlu0 %213
      %vm215 = vcmask 1014784
      %v216 = vsel %vm215, %v212, %v214
      %220 = vset.pattern.permute.xlu0 40
      %221 = vperm.xlu0 %220, %v184
      %v222 = vpop.permute.xlu0 %221
      %vm224 = vcmask 326656
      %v225 = vsel %vm224, %v184, 0
      %227 = vmatprep.subr.mxu0 0.0
      %228 = vmatpush1.msra.mxu0 0.0
      %229 = vmatprep.subr.mxu0 0.0
      %230 = vmatpush1.msra.mxu0 0.0
      %231 = vmatprep.subr.mxu0 0.0
      %232 = vmatpush1.msra.mxu0 0.0
      %233 = vmatprep.subr.mxu0 0.0
      %234 = vmatpush1.msra.mxu0 0.0
      %235 = vmatprep.subr.mxu0 0.0
      %236 = vmatpush1.msra.mxu0 0.0
      %237 = vmatprep.subr.mxu0 0.0
      %238 = vmatpush1.msra.mxu0 0.0
      %239 = vmatprep.subr.mxu0 0.0
      %240 = vmatpush1.msra.mxu0 0.0
      %241 = vmatprep.subr.mxu0 0.0
      %242 = vmatpush1.msra.mxu0 0.0
      %243 = vmatprep.subr.mxu0 0.0
      %244 = vmatpush1.msra.mxu0 0.0
      %245 = vmatprep.subr.mxu0 0.0
      %246 = vmatpush1.msra.mxu0 0.0
      %247 = vmatprep.subr.mxu0 0.0
      %248 = vmatpush1.msra.mxu0 0.0
      %249 = vmatprep.subr.mxu0 %v214
      %250 = vmatpush1.msra.mxu0 %v216
      %251 = vmatprep.subr.mxu0 %v206
      %252 = vmatpush1.msra.mxu0 %v208
      %253 = vmatprep.subr.mxu0 %v198
      %254 = vmatpush1.msra.mxu0 %v200
      %255 = vmatprep.subr.mxu0 %v190
      %256 = vmatpush1.msra.mxu0 %v192
      %257 = vmatprep.subr.mxu0 %v183
      %258 = vmatpush1.msra.mxu0 %v182
      %259 = vmatprep.subr.mxu0 0.0
      %260 = vmatpush2.msra.mxu0 0.0
      %261 = vmatprep.subr.mxu0 0.0
      %262 = vmatpush2.msra.mxu0 0.0
      %263 = vmatprep.subr.mxu0 0.0
      %264 = vmatpush2.msra.mxu0 0.0
      %265 = vmatprep.subr.mxu0 0.0
      %266 = vmatpush2.msra.mxu0 0.0
      %267 = vmatprep.subr.mxu0 0.0
      %268 = vmatpush2.msra.mxu0 0.0
      %269 = vmatprep.subr.mxu0 0.0
      %270 = vmatpush2.msra.mxu0 0.0
      %271 = vmatprep.subr.mxu0 0.0
      %272 = vmatpush2.msra.mxu0 0.0
      %273 = vmatprep.subr.mxu0 0.0
      %274 = vmatpush2.msra.mxu0 0.0
      %275 = vmatprep.subr.mxu0 0.0
      %276 = vmatpush2.msra.mxu0 0.0
      %277 = vmatprep.subr.mxu0 0.0
      %278 = vmatpush2.msra.mxu0 0.0
      %279 = vmatprep.subr.mxu0 0.0
      %280 = vmatpush2.msra.mxu0 0.0
      %281 = vmatprep.subr.mxu0 0.0
      %282 = vmatpush2.msra.mxu0 0.0
      %283 = vmatprep.subr.mxu0 0.0
      %284 = vmatpush2.msra.mxu0 0.0
      %285 = vmatprep.subr.mxu0 0.0
      %286 = vmatpush2.msra.mxu0 0.0
      %287 = vmatprep.subr.mxu0 0.0
      %288 = vmatpush2.msra.mxu0 0.0
      %289 = vmatprep.subr.mxu0 0.0
      %290 = vmatpush2.msra.mxu0 0.0
      %291 = vmatprep.mubr.f32.mxu0 0.0
      %292 = vmatmul.mubr.f32.gmra.mxu0 %v225
      %v293 = vpop.f32.mrf.mxu0
      %v294 = vadd.f32 %v222, %v293
      %v295 = vpop.f32.mrf.mxu0
      %v296 = vadd.f32 %v222, %v295
      %297 = vdwg.mxu0
      %v298 = vld [vmem:[%s1 + $0xa8] sm:$0xff]
      %v299 = vld [vmem:[%s1 + $0xc0] sm:$0xff]
      %v300 = vld [vmem:[%s1 + $0xd8] sm:$0xff]
      %v301 = vld [vmem:[%s1 + $0xf0] sm:$0xff]
      %v302 = vld [vmem:[%s1 + $0x108] sm:$0xff]
      %v303 = vld [vmem:[%s1 + $0x120] sm:$0xff]
      %v304 = vld [vmem:[%s1 + $0x138] sm:$0xff]
      %v305 = vld [vmem:[%s1 + $0x150] sm:$0xff]
      %v306 = vld [vmem:[%s1 + $0x168] sm:$0xff]
      %v307 = vld [vmem:[%s1 + $0x180] sm:$0xff]
      %v308 = vld [vmem:[%s1 + $0x198] sm:$0xff]
      %v309 = vld [vmem:[%s1 + $0x1b0] sm:$0xff]
      %v310 = vld [vmem:[%s1 + $0x1c8] sm:$0xff]
      %v311 = vld [vmem:[%s1 + $0x1e0] sm:$0xff]
      %v312 = vld [vmem:[%s1 + $0x1f8] sm:$0xff]
      %v313 = vld [vmem:[%s1 + $0x210] sm:$0xff]
      %v314 = vld [vmem:[%s1 + $0x228] sm:$0xff]
      %v315 = vld [vmem:[%s1 + $0x240] sm:$0xff]
      %v316 = vld [vmem:[%s1 + $0x258] sm:$0xff]
      %v317 = vld [vmem:[%s1 + $0x270] sm:$0xff]
      %v318 = vld [vmem:[%s1 + $0x288] sm:$0xff]
      %v319 = vld [vmem:[%s1 + $0x2a0] sm:$0xff]
      %v320 = vld [vmem:[%s1 + $0x2b8] sm:$0xff]
      %v321 = vld [vmem:[%s1 + $0x2d0] sm:$0xff]
      %v322 = vld [vmem:[%s1 + $0x2e8] sm:$0xff]
      %v323 = vld [vmem:[%s1 + $0x300] sm:$0xff]
      %v324 = vld [vmem:[%s1 + $0x318] sm:$0xff]
      %v325 = vld [vmem:[%s1 + $0x330] sm:$0xff]
      %v326 = vld [vmem:[%s1 + $0x348] sm:$0xff]
      %v327 = vld [vmem:[%s1 + $0x360] sm:$0xff]
      %v328 = vld [vmem:[%s1 + $0x378] sm:$0xff]
      %v329 = vld [vmem:[%s1 + $0x390] sm:$0xf]
      %v331 = vsel %vm215, %v296, 0
      %vm333 = vcmask 1043456
      %v335 = vsel %vm333, %v329, 0
      %337 = vmatprep.subr.mxu0 0.0
      %338 = vmatpush1.msra.mxu0 %v313
      %339 = vmatprep.subr.mxu0 0.0
      %340 = vmatpush1.msra.mxu0 %v312
      %341 = vmatprep.subr.mxu0 0.0
      %342 = vmatpush1.msra.mxu0 %v311
      %343 = vmatprep.subr.mxu0 0.0
      %344 = vmatpush1.msra.mxu0 %v310
      %345 = vmatprep.subr.mxu0 0.0
      %346 = vmatpush1.msra.mxu0 %v309
      %347 = vmatprep.subr.mxu0 0.0
      %348 = vmatpush1.msra.mxu0 %v308
      %349 = vmatprep.subr.mxu0 0.0
      %350 = vmatpush1.msra.mxu0 %v307
      %351 = vmatprep.subr.mxu0 0.0
      %352 = vmatpush1.msra.mxu0 %v306
      %353 = vmatprep.subr.mxu0 0.0
      %354 = vmatpush1.msra.mxu0 %v305
      %355 = vmatprep.subr.mxu0 0.0
      %356 = vmatpush1.msra.mxu0 %v304
      %357 = vmatprep.subr.mxu0 0.0
      %358 = vmatpush1.msra.mxu0 %v303
      %359 = vmatprep.subr.mxu0 0.0
      %360 = vmatpush1.msra.mxu0 %v302
      %361 = vmatprep.subr.mxu0 0.0
      %362 = vmatpush1.msra.mxu0 %v301
      %363 = vmatprep.subr.mxu0 0.0
      %364 = vmatpush1.msra.mxu0 %v300
      %365 = vmatprep.subr.mxu0 0.0
      %366 = vmatpush1.msra.mxu0 %v299
      %367 = vmatprep.subr.mxu0 0.0
      %368 = vmatpush1.msra.mxu0 %v298
      %369 = vmatprep.subr.mxu0 0.0
      %370 = vmatpush2.msra.mxu0 %v335
      %371 = vmatprep.subr.mxu0 0.0
      %372 = vmatpush2.msra.mxu0 %v328
      %373 = vmatprep.subr.mxu0 0.0
      %374 = vmatpush2.msra.mxu0 %v327
      %375 = vmatprep.subr.mxu0 0.0
      %376 = vmatpush2.msra.mxu0 %v326
      %377 = vmatprep.subr.mxu0 0.0
      %378 = vmatpush2.msra.mxu0 %v325
      %379 = vmatprep.subr.mxu0 0.0
      %380 = vmatpush2.msra.mxu0 %v324
      %381 = vmatprep.subr.mxu0 0.0
      %382 = vmatpush2.msra.mxu0 %v323
      %383 = vmatprep.subr.mxu0 0.0
      %384 = vmatpush2.msra.mxu0 %v322
      %385 = vmatprep.subr.mxu0 0.0
      %386 = vmatpush2.msra.mxu0 %v321
      %387 = vmatprep.subr.mxu0 0.0
      %388 = vmatpush2.msra.mxu0 %v320
      %389 = vmatprep.subr.mxu0 0.0
      %390 = vmatpush2.msra.mxu0 %v319
      %391 = vmatprep.subr.mxu0 0.0
      %392 = vmatpush2.msra.mxu0 %v318
      %393 = vmatprep.subr.mxu0 0.0
      %394 = vmatpush2.msra.mxu0 %v317
      %395 = vmatprep.subr.mxu0 0.0
      %396 = vmatpush2.msra.mxu0 %v316
      %397 = vmatprep.subr.mxu0 0.0
      %398 = vmatpush2.msra.mxu0 %v315
      %399 = vmatprep.subr.mxu0 0.0
      %400 = vmatpush2.msra.mxu0 %v314
      %401 = vmatprep.mubr.f32.mxu0 %v331
      %402 = vmatmul.mubr.f32.gmra.mxu0 %v294
      %v403 = vpop.f32.mrf.mxu0
      %v404 = vadd.f32 0.0, %v403
      %v405 = vpop.f32.mrf.mxu0
      %406 = vdwg.mxu0
      %vm407 = vcmp.ge.f32.partialorder %v404, 0.0
      %v408 = vmul.f32 %v404, 0.01
      %v409 = vsel %vm407, %v404, %v408
      %v410 = vld [vmem:[%s1 + $0x18] sm:$0xff]
      %412 = vrot.lane.b32.xlu0 %v409, 127
      %v413 = vpop.permute.xlu0 %412
      %415 = vrot.lane.b32.xlu0 %v409, 126
      %v416 = vpop.permute.xlu0 %415
      %418 = vrot.lane.b32.xlu0 %v409, 125
      %v419 = vpop.permute.xlu0 %418
      %421 = vrot.lane.b32.xlu0 %v409, 124
      %v422 = vpop.permute.xlu0 %421
      %425 = vset.pattern.permute.xlu0 40
      %426 = vperm.xlu0 %425, %v410
      %v427 = vpop.permute.xlu0 %426
      %v429 = vsel %vm224, %v410, 0
      %431 = vmatprep.subr.mxu0 0.0
      %432 = vmatpush1.msra.mxu0 0.0
      %433 = vmatprep.subr.mxu0 0.0
      %434 = vmatpush1.msra.mxu0 0.0
      %435 = vmatprep.subr.mxu0 0.0
      %436 = vmatpush1.msra.mxu0 0.0
      %437 = vmatprep.subr.mxu0 0.0
      %438 = vmatpush1.msra.mxu0 0.0
      %439 = vmatprep.subr.mxu0 0.0
      %440 = vmatpush1.msra.mxu0 0.0
      %441 = vmatprep.subr.mxu0 0.0
      %442 = vmatpush1.msra.mxu0 0.0
      %443 = vmatprep.subr.mxu0 0.0
      %444 = vmatpush1.msra.mxu0 0.0
      %445 = vmatprep.subr.mxu0 0.0
      %446 = vmatpush1.msra.mxu0 0.0
      %447 = vmatprep.subr.mxu0 0.0
      %448 = vmatpush1.msra.mxu0 0.0
      %449 = vmatprep.subr.mxu0 0.0
      %450 = vmatpush1.msra.mxu0 0.0
      %451 = vmatprep.subr.mxu0 0.0
      %452 = vmatpush1.msra.mxu0 0.0
      %453 = vmatprep.subr.mxu0 0.0
      %454 = vmatpush1.msra.mxu0 %v422
      %455 = vmatprep.subr.mxu0 0.0
      %456 = vmatpush1.msra.mxu0 %v419
      %457 = vmatprep.subr.mxu0 0.0
      %458 = vmatpush1.msra.mxu0 %v416
      %459 = vmatprep.subr.mxu0 0.0
      %460 = vmatpush1.msra.mxu0 %v413
      %461 = vmatprep.subr.mxu0 0.0
      %462 = vmatpush1.msra.mxu0 %v409
      %463 = vmatprep.subr.mxu0 0.0
      %464 = vmatpush2.msra.mxu0 0.0
      %465 = vmatprep.subr.mxu0 0.0
      %466 = vmatpush2.msra.mxu0 0.0
      %467 = vmatprep.subr.mxu0 0.0
      %468 = vmatpush2.msra.mxu0 0.0
      %469 = vmatprep.subr.mxu0 0.0
      %470 = vmatpush2.msra.mxu0 0.0
      %471 = vmatprep.subr.mxu0 0.0
      %472 = vmatpush2.msra.mxu0 0.0
      %473 = vmatprep.subr.mxu0 0.0
      %474 = vmatpush2.msra.mxu0 0.0
      %475 = vmatprep.subr.mxu0 0.0
      %476 = vmatpush2.msra.mxu0 0.0
      %477 = vmatprep.subr.mxu0 0.0
      %478 = vmatpush2.msra.mxu0 0.0
      %479 = vmatprep.subr.mxu0 0.0
      %480 = vmatpush2.msra.mxu0 0.0
      %481 = vmatprep.subr.mxu0 0.0
      %482 = vmatpush2.msra.mxu0 0.0
      %483 = vmatprep.subr.mxu0 0.0
      %484 = vmatpush2.msra.mxu0 0.0
      %485 = vmatprep.subr.mxu0 0.0
      %486 = vmatpush2.msra.mxu0 0.0
      %487 = vmatprep.subr.mxu0 0.0
      %488 = vmatpush2.msra.mxu0 0.0
      %489 = vmatprep.subr.mxu0 0.0
      %490 = vmatpush2.msra.mxu0 0.0
      %491 = vmatprep.subr.mxu0 0.0
      %492 = vmatpush2.msra.mxu0 0.0
      %493 = vmatprep.subr.mxu0 0.0
      %494 = vmatpush2.msra.mxu0 0.0
      %495 = vmatprep.mubr.f32.mxu0 0.0
      %496 = vmatmul.mubr.f32.gmra.mxu0 %v429
      %v497 = vpop.f32.mrf.mxu0
      %v498 = vadd.f32 %v427, %v497
      %v499 = vpop.f32.mrf.mxu0
      %500 = vdwg.mxu0
      %v501 = vld [vmem:[%s1 + $0x3a8] sm:$0xff]
      %v502 = vld [vmem:[%s1 + $0x3c0] sm:$0xff]
      %v503 = vld [vmem:[%s1 + $0x3d8] sm:$0xff]
      %v504 = vld [vmem:[%s1 + $0x3f0] sm:$0xff]
      %v505 = vld [vmem:[%s1 + $0x408] sm:$0xff]
      %v506 = vld [vmem:[%s1 + $0x420] sm:$0xff]
      %v507 = vld [vmem:[%s1 + $0x438] sm:$0xff]
      %v508 = vld [vmem:[%s1 + $0x450] sm:$0xff]
      %v509 = vld [vmem:[%s1 + $0x468] sm:$0xff]
      %v510 = vld [vmem:[%s1 + $0x480] sm:$0xff]
      %v511 = vld [vmem:[%s1 + $0x498] sm:$0xff]
      %v512 = vld [vmem:[%s1 + $0x4b0] sm:$0xff]
      %v513 = vld [vmem:[%s1 + $0x4c8] sm:$0xff]
      %v514 = vld [vmem:[%s1 + $0x4e0] sm:$0xff]
      %v515 = vld [vmem:[%s1 + $0x4f8] sm:$0xf]
      %vm516 = vcmask 949248
      %v518 = vsel %vm516, %v498, 0
      %v521 = vsel %vm333, %v515, 0
      %523 = vmatprep.subr.mxu0 0.0
      %524 = vmatpush1.msra.mxu0 0.0
      %525 = vmatprep.subr.mxu0 0.0
      %526 = vmatpush1.msra.mxu0 %v521
      %527 = vmatprep.subr.mxu0 0.0
      %528 = vmatpush1.msra.mxu0 %v514
      %529 = vmatprep.subr.mxu0 0.0
      %530 = vmatpush1.msra.mxu0 %v513
      %531 = vmatprep.subr.mxu0 0.0
      %532 = vmatpush1.msra.mxu0 %v512
      %533 = vmatprep.subr.mxu0 0.0
      %534 = vmatpush1.msra.mxu0 %v511
      %535 = vmatprep.subr.mxu0 0.0
      %536 = vmatpush1.msra.mxu0 %v510
      %537 = vmatprep.subr.mxu0 0.0
      %538 = vmatpush1.msra.mxu0 %v509
      %539 = vmatprep.subr.mxu0 0.0
      %540 = vmatpush1.msra.mxu0 %v508
      %541 = vmatprep.subr.mxu0 0.0
      %542 = vmatpush1.msra.mxu0 %v507
      %543 = vmatprep.subr.mxu0 0.0
      %544 = vmatpush1.msra.mxu0 %v506
      %545 = vmatprep.subr.mxu0 0.0
      %546 = vmatpush1.msra.mxu0 %v505
      %547 = vmatprep.subr.mxu0 0.0
      %548 = vmatpush1.msra.mxu0 %v504
      %549 = vmatprep.subr.mxu0 0.0
      %550 = vmatpush1.msra.mxu0 %v503
      %551 = vmatprep.subr.mxu0 0.0
      %552 = vmatpush1.msra.mxu0 %v502
      %553 = vmatprep.subr.mxu0 0.0
      %554 = vmatpush1.msra.mxu0 %v501
      %555 = vmatprep.subr.mxu0 0.0
      %556 = vmatpush2.msra.mxu0 0.0
      %557 = vmatprep.subr.mxu0 0.0
      %558 = vmatpush2.msra.mxu0 0.0
      %559 = vmatprep.subr.mxu0 0.0
      %560 = vmatpush2.msra.mxu0 0.0
      %561 = vmatprep.subr.mxu0 0.0
      %562 = vmatpush2.msra.mxu0 0.0
      %563 = vmatprep.subr.mxu0 0.0
      %564 = vmatpush2.msra.mxu0 0.0
      %565 = vmatprep.subr.mxu0 0.0
      %566 = vmatpush2.msra.mxu0 0.0
      %567 = vmatprep.subr.mxu0 0.0
      %568 = vmatpush2.msra.mxu0 0.0
      %569 = vmatprep.subr.mxu0 0.0
      %570 = vmatpush2.msra.mxu0 0.0
      %571 = vmatprep.subr.mxu0 0.0
      %572 = vmatpush2.msra.mxu0 0.0
      %573 = vmatprep.subr.mxu0 0.0
      %574 = vmatpush2.msra.mxu0 0.0
      %575 = vmatprep.subr.mxu0 0.0
      %576 = vmatpush2.msra.mxu0 0.0
      %577 = vmatprep.subr.mxu0 0.0
      %578 = vmatpush2.msra.mxu0 0.0
      %579 = vmatprep.subr.mxu0 0.0
      %580 = vmatpush2.msra.mxu0 0.0
      %581 = vmatprep.subr.mxu0 0.0
      %582 = vmatpush2.msra.mxu0 0.0
      %583 = vmatprep.subr.mxu0 0.0
      %584 = vmatpush2.msra.mxu0 0.0
      %585 = vmatprep.subr.mxu0 0.0
      %586 = vmatpush2.msra.mxu0 0.0
      %587 = vmatprep.mubr.f32.mxu0 0.0
      %588 = vmatmul.mubr.f32.gmra.mxu0 %v518
      %v589 = vpop.f32.mrf.mxu0
      %v590 = vadd.f32 0.0, %v589
      %v591 = vpop.f32.mrf.mxu0
      %592 = vdwg.mxu0
      %vm593 = vcmp.ge.f32.partialorder %v590, 0.0
      %v594 = vmul.f32 %v590, 0.01
      %v595 = vsel %vm593, %v590, %v594
      %v596 = vld [vmem:[%s1 + $0x30] sm:$0xff]
      %v597 = vld [vmem:[%s1 + $0x48] sm:$0xff]
      %599 = vrot.lane.b32.xlu0 %v595, 127
      %v600 = vpop.permute.xlu0 %599
      %602 = vrot.lane.b32.xlu0 %v595, 126
      %v603 = vpop.permute.xlu0 %602
      %605 = vrot.lane.b32.xlu0 %v595, 125
      %v606 = vpop.permute.xlu0 %605
      %608 = vrot.lane.b32.xlu0 %v595, 124
      %v609 = vpop.permute.xlu0 %608
      %612 = vset.pattern.permute.xlu0 40
      %613 = vperm.xlu0 %612, %v596
      %v614 = vpop.permute.xlu0 %613
      %617 = vset.pattern.permute.xlu0 40
      %618 = vperm.xlu0 %617, %v597
      %v619 = vpop.permute.xlu0 %618
      %v621 = vsel %vm224, %v596, 0
      %v623 = vsel %vm224, %v597, 0
      %625 = vmatprep.subr.mxu0 0.0
      %626 = vmatpush1.msra.mxu0 0.0
      %627 = vmatprep.subr.mxu0 0.0
      %628 = vmatpush1.msra.mxu0 0.0
      %629 = vmatprep.subr.mxu0 0.0
      %630 = vmatpush1.msra.mxu0 0.0
      %631 = vmatprep.subr.mxu0 0.0
      %632 = vmatpush1.msra.mxu0 0.0
      %633 = vmatprep.subr.mxu0 0.0
      %634 = vmatpush1.msra.mxu0 0.0
      %635 = vmatprep.subr.mxu0 0.0
      %636 = vmatpush1.msra.mxu0 0.0
      %637 = vmatprep.subr.mxu0 0.0
      %638 = vmatpush1.msra.mxu0 0.0
      %639 = vmatprep.subr.mxu0 0.0
      %640 = vmatpush1.msra.mxu0 0.0
      %641 = vmatprep.subr.mxu0 0.0
      %642 = vmatpush1.msra.mxu0 0.0
      %643 = vmatprep.subr.mxu0 0.0
      %644 = vmatpush1.msra.mxu0 0.0
      %645 = vmatprep.subr.mxu0 0.0
      %646 = vmatpush1.msra.mxu0 0.0
      %647 = vmatprep.subr.mxu0 0.0
      %648 = vmatpush1.msra.mxu0 %v609
      %649 = vmatprep.subr.mxu0 0.0
      %650 = vmatpush1.msra.mxu0 %v606
      %651 = vmatprep.subr.mxu0 0.0
      %652 = vmatpush1.msra.mxu0 %v603
      %653 = vmatprep.subr.mxu0 0.0
      %654 = vmatpush1.msra.mxu0 %v600
      %655 = vmatprep.subr.mxu0 0.0
      %656 = vmatpush1.msra.mxu0 %v595
      %657 = vmatprep.subr.mxu0 0.0
      %658 = vmatpush2.msra.mxu0 0.0
      %659 = vmatprep.subr.mxu0 0.0
      %660 = vmatpush2.msra.mxu0 0.0
      %661 = vmatprep.subr.mxu0 0.0
      %662 = vmatpush2.msra.mxu0 0.0
      %663 = vmatprep.subr.mxu0 0.0
      %664 = vmatpush2.msra.mxu0 0.0
      %665 = vmatprep.subr.mxu0 0.0
      %666 = vmatpush2.msra.mxu0 0.0
      %667 = vmatprep.subr.mxu0 0.0
      %668 = vmatpush2.msra.mxu0 0.0
      %669 = vmatprep.subr.mxu0 0.0
      %670 = vmatpush2.msra.mxu0 0.0
      %671 = vmatprep.subr.mxu0 0.0
      %672 = vmatpush2.msra.mxu0 0.0
      %673 = vmatprep.subr.mxu0 0.0
      %674 = vmatpush2.msra.mxu0 0.0
      %675 = vmatprep.subr.mxu0 0.0
      %676 = vmatpush2.msra.mxu0 0.0
      %677 = vmatprep.subr.mxu0 0.0
      %678 = vmatpush2.msra.mxu0 0.0
      %679 = vmatprep.subr.mxu0 0.0
      %680 = vmatpush2.msra.mxu0 0.0
      %681 = vmatprep.subr.mxu0 0.0
      %682 = vmatpush2.msra.mxu0 0.0
      %683 = vmatprep.subr.mxu0 0.0
      %684 = vmatpush2.msra.mxu0 0.0
      %685 = vmatprep.subr.mxu0 0.0
      %686 = vmatpush2.msra.mxu0 0.0
      %687 = vmatprep.subr.mxu0 0.0
      %688 = vmatpush2.msra.mxu0 0.0
      %689 = vmatprep.mubr.f32.mxu0 0.0
      %690 = vmatmul.mubr.f32.gmra.mxu0 %v621
      %v691 = vpop.f32.mrf.mxu0
      %v692 = vadd.f32 %v614, %v691
      %v693 = vpop.f32.mrf.mxu0
      %694 = vmatprep.mubr.f32.mxu0 0.0
      %695 = vmatmul.mubr.f32.gmra.mxu0 %v623
      %v696 = vpop.f32.mrf.mxu0
      %v697 = vadd.f32 %v619, %v696
      %v698 = vpop.f32.mrf.mxu0
      %699 = vdwg.mxu0
      %v700 = vld [vmem:[%s1 + $0x510] sm:$0xff]
      %v701 = vld [vmem:[%s1 + $0x528] sm:$0xff]
      %v702 = vld [vmem:[%s1 + $0x540] sm:$0xff]
      %v703 = vld [vmem:[%s1 + $0x558] sm:$0xff]
      %v704 = vld [vmem:[%s1 + $0x570] sm:$0xff]
      %v705 = vld [vmem:[%s1 + $0x588] sm:$0xff]
      %vm706 = vcmask 392192
      %v708 = vsel %vm706, %v692, 0
      %v711 = vsel %vm706, %v697, 0
      %713 = vmatprep.subr.mxu0 0.0
      %714 = vmatpush1.msra.mxu0 0.0
      %715 = vmatprep.subr.mxu0 0.0
      %716 = vmatpush1.msra.mxu0 0.0
      %717 = vmatprep.subr.mxu0 0.0
      %718 = vmatpush1.msra.mxu0 0.0
      %719 = vmatprep.subr.mxu0 0.0
      %720 = vmatpush1.msra.mxu0 0.0
      %721 = vmatprep.subr.mxu0 0.0
      %722 = vmatpush1.msra.mxu0 0.0
      %723 = vmatprep.subr.mxu0 0.0
      %724 = vmatpush1.msra.mxu0 0.0
      %725 = vmatprep.subr.mxu0 0.0
      %726 = vmatpush1.msra.mxu0 0.0
      %727 = vmatprep.subr.mxu0 0.0
      %728 = vmatpush1.msra.mxu0 0.0
      %729 = vmatprep.subr.mxu0 0.0
      %730 = vmatpush1.msra.mxu0 0.0
      %731 = vmatprep.subr.mxu0 0.0
      %732 = vmatpush1.msra.mxu0 0.0
      %733 = vmatprep.subr.mxu0 0.0
      %734 = vmatpush1.msra.mxu0 %v705
      %735 = vmatprep.subr.mxu0 0.0
      %736 = vmatpush1.msra.mxu0 %v704
      %737 = vmatprep.subr.mxu0 0.0
      %738 = vmatpush1.msra.mxu0 %v703
      %739 = vmatprep.subr.mxu0 0.0
      %740 = vmatpush1.msra.mxu0 %v702
      %741 = vmatprep.subr.mxu0 0.0
      %742 = vmatpush1.msra.mxu0 %v701
      %743 = vmatprep.subr.mxu0 0.0
      %744 = vmatpush1.msra.mxu0 %v700
      %745 = vmatprep.subr.mxu0 0.0
      %746 = vmatpush2.msra.mxu0 0.0
      %747 = vmatprep.subr.mxu0 0.0
      %748 = vmatpush2.msra.mxu0 0.0
      %749 = vmatprep.subr.mxu0 0.0
      %750 = vmatpush2.msra.mxu0 0.0
      %751 = vmatprep.subr.mxu0 0.0
      %752 = vmatpush2.msra.mxu0 0.0
      %753 = vmatprep.subr.mxu0 0.0
      %754 = vmatpush2.msra.mxu0 0.0
      %755 = vmatprep.subr.mxu0 0.0
      %756 = vmatpush2.msra.mxu0 0.0
      %757 = vmatprep.subr.mxu0 0.0
      %758 = vmatpush2.msra.mxu0 0.0
      %759 = vmatprep.subr.mxu0 0.0
      %760 = vmatpush2.msra.mxu0 0.0
      %761 = vmatprep.subr.mxu0 0.0
      %762 = vmatpush2.msra.mxu0 0.0
      %763 = vmatprep.subr.mxu0 0.0
      %764 = vmatpush2.msra.mxu0 0.0
      %765 = vmatprep.subr.mxu0 0.0
      %766 = vmatpush2.msra.mxu0 0.0
      %767 = vmatprep.subr.mxu0 0.0
      %768 = vmatpush2.msra.mxu0 0.0
      %769 = vmatprep.subr.mxu0 0.0
      %770 = vmatpush2.msra.mxu0 0.0
      %771 = vmatprep.subr.mxu0 0.0
      %772 = vmatpush2.msra.mxu0 0.0
      %773 = vmatprep.subr.mxu0 0.0
      %774 = vmatpush2.msra.mxu0 0.0
      %775 = vmatprep.subr.mxu0 0.0
      %776 = vmatpush2.msra.mxu0 0.0
      %777 = vmatprep.mubr.f32.mxu0 0.0
      %778 = vmatmul.mubr.f32.gmra.mxu0 %v708
      %v779 = vpop.f32.mrf.mxu0
      %v780 = vadd.f32 0.0, %v779
      %v781 = vpop.f32.mrf.mxu0
      %782 = vmatprep.mubr.f32.mxu0 0.0
      %783 = vmatmul.mubr.f32.gmra.mxu0 %v711
      %v784 = vpop.f32.mrf.mxu0
      %v785 = vadd.f32 0.0, %v784
      %v786 = vpop.f32.mrf.mxu0
      %787 = vdwg.mxu0
      %vm788 = vcmp.ge.f32.partialorder %v780, 0.0
      %vm789 = vcmp.ge.f32.partialorder %v785, 0.0
      %v790 = vmul.f32 %v780, 0.01
      %v791 = vmul.f32 %v785, 0.01
      %v792 = vsel %vm788, %v780, %v790
      %v793 = vsel %vm789, %v785, %v791
      %vm794 = vcmask 293888
      %795 = vst.msk [vmem:[%s181] sm:$0xff] %vm794, %v792
      %796 = vst.msk [vmem:[%s181 + $0x8] sm:$0xff] %vm794, %v793
      %v797 = vld [vmem:[%s1 + $0x5a0] sm:$0xff]
      %v798 = vld [vmem:[%s1 + $0x5b8] sm:$0xff]
      %v799 = vld [vmem:[%s1 + $0x5d0] sm:$0xff]
      %v800 = vld [vmem:[%s1 + $0x5e8] sm:$0xff]
      %v801 = vld [vmem:[%s1 + $0x600] sm:$0xf]
      %v803 = vsel %vm794, %v792, 0
      %v806 = vsel %vm794, %v793, 0
      %v809 = vsel %vm333, %v801, 0
      %811 = vmatprep.subr.mxu0 0.0
      %812 = vmatpush1.msra.mxu0 0.0
      %813 = vmatprep.subr.mxu0 0.0
      %814 = vmatpush1.msra.mxu0 0.0
      %815 = vmatprep.subr.mxu0 0.0
      %816 = vmatpush1.msra.mxu0 0.0
      %817 = vmatprep.subr.mxu0 0.0
      %818 = vmatpush1.msra.mxu0 0.0
      %819 = vmatprep.subr.mxu0 0.0
      %820 = vmatpush1.msra.mxu0 0.0
      %821 = vmatprep.subr.mxu0 0.0
      %822 = vmatpush1.msra.mxu0 0.0
      %823 = vmatprep.subr.mxu0 0.0
      %824 = vmatpush1.msra.mxu0 0.0
      %825 = vmatprep.subr.mxu0 0.0
      %826 = vmatpush1.msra.mxu0 0.0
      %827 = vmatprep.subr.mxu0 0.0
      %828 = vmatpush1.msra.mxu0 0.0
      %829 = vmatprep.subr.mxu0 0.0
      %830 = vmatpush1.msra.mxu0 0.0
      %831 = vmatprep.subr.mxu0 0.0
      %832 = vmatpush1.msra.mxu0 0.0
      %833 = vmatprep.subr.mxu0 0.0
      %834 = vmatpush1.msra.mxu0 %v809
      %835 = vmatprep.subr.mxu0 0.0
      %836 = vmatpush1.msra.mxu0 %v800
      %837 = vmatprep.subr.mxu0 0.0
      %838 = vmatpush1.msra.mxu0 %v799
      %839 = vmatprep.subr.mxu0 0.0
      %840 = vmatpush1.msra.mxu0 %v798
      %841 = vmatprep.subr.mxu0 0.0
      %842 = vmatpush1.msra.mxu0 %v797
      %843 = vmatprep.subr.mxu0 0.0
      %844 = vmatpush2.msra.mxu0 0.0
      %845 = vmatprep.subr.mxu0 0.0
      %846 = vmatpush2.msra.mxu0 0.0
      %847 = vmatprep.subr.mxu0 0.0
      %848 = vmatpush2.msra.mxu0 0.0
      %849 = vmatprep.subr.mxu0 0.0
      %850 = vmatpush2.msra.mxu0 0.0
      %851 = vmatprep.subr.mxu0 0.0
      %852 = vmatpush2.msra.mxu0 0.0
      %853 = vmatprep.subr.mxu0 0.0
      %854 = vmatpush2.msra.mxu0 0.0
      %855 = vmatprep.subr.mxu0 0.0
      %856 = vmatpush2.msra.mxu0 0.0
      %857 = vmatprep.subr.mxu0 0.0
      %858 = vmatpush2.msra.mxu0 0.0
      %859 = vmatprep.subr.mxu0 0.0
      %860 = vmatpush2.msra.mxu0 0.0
      %861 = vmatprep.subr.mxu0 0.0
      %862 = vmatpush2.msra.mxu0 0.0
      %863 = vmatprep.subr.mxu0 0.0
      %864 = vmatpush2.msra.mxu0 0.0
      %865 = vmatprep.subr.mxu0 0.0
      %866 = vmatpush2.msra.mxu0 0.0
      %867 = vmatprep.subr.mxu0 0.0
      %868 = vmatpush2.msra.mxu0 0.0
      %869 = vmatprep.subr.mxu0 0.0
      %870 = vmatpush2.msra.mxu0 0.0
      %871 = vmatprep.subr.mxu0 0.0
      %872 = vmatpush2.msra.mxu0 0.0
      %873 = vmatprep.subr.mxu0 0.0
      %874 = vmatpush2.msra.mxu0 0.0
      %875 = vmatprep.mubr.f32.mxu0 0.0
      %876 = vmatmul.mubr.f32.gmra.mxu0 %v803
      %v877 = vpop.f32.mrf.mxu0
      %v878 = vadd.f32 0.0, %v877
      %v879 = vpop.f32.mrf.mxu0
      %880 = vmatprep.mubr.f32.mxu0 0.0
      %881 = vmatmul.mubr.f32.gmra.mxu0 %v806
      %v882 = vpop.f32.mrf.mxu0
      %v883 = vadd.f32 0.0, %v882
      %v884 = vpop.f32.mrf.mxu0
      %885 = vdwg.mxu0
      %v886 = vld [vmem:[%s1 + $0x60] sm:$0xff]
      %889 = vrot.lane.b32.xlu0 %v878, 127
      %v890 = vpop.permute.xlu0 %889
      %891 = vrot.lane.b32.xlu0 %v883, 127
      %v892 = vpop.permute.xlu0 %891
      %895 = vrot.lane.b32.xlu0 %v878, 126
      %v896 = vpop.permute.xlu0 %895
      %897 = vrot.lane.b32.xlu0 %v883, 126
      %v898 = vpop.permute.xlu0 %897
      %901 = vrot.lane.b32.xlu0 %v878, 125
      %v902 = vpop.permute.xlu0 %901
      %903 = vrot.lane.b32.xlu0 %v883, 125
      %v904 = vpop.permute.xlu0 %903
      %907 = vrot.lane.b32.xlu0 %v878, 124
      %v908 = vpop.permute.xlu0 %907
      %909 = vrot.lane.b32.xlu0 %v883, 124
      %v910 = vpop.permute.xlu0 %909
      %914 = vset.pattern.permute.xlu0 80
      %915 = vperm.xlu0 %914, %v886
      %v916 = vpop.permute.xlu0 %915
      %vm918 = vcmask 654336
      %v919 = vsel %vm918, %v886, 0
      %921 = vmatprep.subr.mxu0 0.0
      %922 = vmatpush1.msra.mxu0 0.0
      %923 = vmatprep.subr.mxu0 0.0
      %924 = vmatpush1.msra.mxu0 0.0
      %925 = vmatprep.subr.mxu0 0.0
      %926 = vmatpush1.msra.mxu0 0.0
      %927 = vmatprep.subr.mxu0 0.0
      %928 = vmatpush1.msra.mxu0 0.0
      %929 = vmatprep.subr.mxu0 0.0
      %930 = vmatpush1.msra.mxu0 0.0
      %931 = vmatprep.subr.mxu0 0.0
      %932 = vmatpush1.msra.mxu0 0.0
      %933 = vmatprep.subr.mxu0 0.0
      %934 = vmatpush1.msra.mxu0 %v910
      %935 = vmatprep.subr.mxu0 0.0
      %936 = vmatpush1.msra.mxu0 %v908
      %937 = vmatprep.subr.mxu0 0.0
      %938 = vmatpush1.msra.mxu0 %v904
      %939 = vmatprep.subr.mxu0 0.0
      %940 = vmatpush1.msra.mxu0 %v902
      %941 = vmatprep.subr.mxu0 0.0
      %942 = vmatpush1.msra.mxu0 %v898
      %943 = vmatprep.subr.mxu0 0.0
      %944 = vmatpush1.msra.mxu0 %v896
      %945 = vmatprep.subr.mxu0 0.0
      %946 = vmatpush1.msra.mxu0 %v892
      %947 = vmatprep.subr.mxu0 0.0
      %948 = vmatpush1.msra.mxu0 %v890
      %949 = vmatprep.subr.mxu0 0.0
      %950 = vmatpush1.msra.mxu0 %v883
      %951 = vmatprep.subr.mxu0 0.0
      %952 = vmatpush1.msra.mxu0 %v878
      %953 = vmatprep.subr.mxu0 0.0
      %954 = vmatpush2.msra.mxu0 0.0
      %955 = vmatprep.subr.mxu0 0.0
      %956 = vmatpush2.msra.mxu0 0.0
      %957 = vmatprep.subr.mxu0 0.0
      %958 = vmatpush2.msra.mxu0 0.0
      %959 = vmatprep.subr.mxu0 0.0
      %960 = vmatpush2.msra.mxu0 0.0
      %961 = vmatprep.subr.mxu0 0.0
      %962 = vmatpush2.msra.mxu0 0.0
      %963 = vmatprep.subr.mxu0 0.0
      %964 = vmatpush2.msra.mxu0 0.0
      %965 = vmatprep.subr.mxu0 0.0
      %966 = vmatpush2.msra.mxu0 0.0
      %967 = vmatprep.subr.mxu0 0.0
      %968 = vmatpush2.msra.mxu0 0.0
      %969 = vmatprep.subr.mxu0 0.0
      %970 = vmatpush2.msra.mxu0 0.0
      %971 = vmatprep.subr.mxu0 0.0
      %972 = vmatpush2.msra.mxu0 0.0
      %973 = vmatprep.subr.mxu0 0.0
      %974 = vmatpush2.msra.mxu0 0.0
      %975 = vmatprep.subr.mxu0 0.0
      %976 = vmatpush2.msra.mxu0 0.0
      %977 = vmatprep.subr.mxu0 0.0
      %978 = vmatpush2.msra.mxu0 0.0
      %979 = vmatprep.subr.mxu0 0.0
      %980 = vmatpush2.msra.mxu0 0.0
      %981 = vmatprep.subr.mxu0 0.0
      %982 = vmatpush2.msra.mxu0 0.0
      %983 = vmatprep.subr.mxu0 0.0
      %984 = vmatpush2.msra.mxu0 0.0
      %985 = vmatprep.mubr.f32.mxu0 0.0
      %986 = vmatmul.mubr.f32.gmra.mxu0 %v919
      %v987 = vpop.f32.mrf.mxu0
      %v988 = vadd.f32 %v916, %v987
      %v989 = vpop.f32.mrf.mxu0
      %990 = vdwg.mxu0
      %v991 = vld [vmem:[%s1 + $0x618] sm:$0xff]
      %v992 = vld [vmem:[%s1 + $0x620] sm:$0xff]
      %v993 = vld [vmem:[%s1 + $0x630] sm:$0xff]
      %v994 = vld [vmem:[%s1 + $0x638] sm:$0xff]
      %v995 = vld [vmem:[%s1 + $0x648] sm:$0xff]
      %v996 = vld [vmem:[%s1 + $0x650] sm:$0xff]
      %v997 = vld [vmem:[%s1 + $0x660] sm:$0xff]
      %v998 = vld [vmem:[%s1 + $0x668] sm:$0xff]
      %v999 = vld [vmem:[%s1 + $0x678] sm:$0xff]
      %v1000 = vld [vmem:[%s1 + $0x680] sm:$0xff]
      %v1001 = vld [vmem:[%s1 + $0x690] sm:$0xff]
      %v1002 = vld [vmem:[%s1 + $0x698] sm:$0xff]
      %v1003 = vld [vmem:[%s1 + $0x6a8] sm:$0xff]
      %v1004 = vld [vmem:[%s1 + $0x6b0] sm:$0xff]
      %v1005 = vld [vmem:[%s1 + $0x6c0] sm:$0xff]
      %v1006 = vld [vmem:[%s1 + $0x6c8] sm:$0xff]
      %vm1007 = vcmask 523264
      %v1009 = vsel %vm1007, %v988, 0
      %1011 = vmatprep.subr.mxu0 0.0
      %1012 = vmatpush1.msra.mxu0 0.0
      %1013 = vmatprep.subr.mxu0 0.0
      %1014 = vmatpush1.msra.mxu0 0.0
      %1015 = vmatprep.subr.mxu0 0.0
      %1016 = vmatpush1.msra.mxu0 0.0
      %1017 = vmatprep.subr.mxu0 0.0
      %1018 = vmatpush1.msra.mxu0 0.0
      %1019 = vmatprep.subr.mxu0 0.0
      %1020 = vmatpush1.msra.mxu0 0.0
      %1021 = vmatprep.subr.mxu0 0.0
      %1022 = vmatpush1.msra.mxu0 0.0
      %1023 = vmatprep.subr.mxu0 0.0
      %1024 = vmatpush1.msra.mxu0 0.0
      %1025 = vmatprep.subr.mxu0 0.0
      %1026 = vmatpush1.msra.mxu0 0.0
      %1027 = vmatprep.subr.mxu0 %v1006
      %1028 = vmatpush1.msra.mxu0 %v1005
      %1029 = vmatprep.subr.mxu0 %v1004
      %1030 = vmatpush1.msra.mxu0 %v1003
      %1031 = vmatprep.subr.mxu0 %v1002
      %1032 = vmatpush1.msra.mxu0 %v1001
      %1033 = vmatprep.subr.mxu0 %v1000
      %1034 = vmatpush1.msra.mxu0 %v999
      %1035 = vmatprep.subr.mxu0 %v998
      %1036 = vmatpush1.msra.mxu0 %v997
      %1037 = vmatprep.subr.mxu0 %v996
      %1038 = vmatpush1.msra.mxu0 %v995
      %1039 = vmatprep.subr.mxu0 %v994
      %1040 = vmatpush1.msra.mxu0 %v993
      %1041 = vmatprep.subr.mxu0 %v992
      %1042 = vmatpush1.msra.mxu0 %v991
      %1043 = vmatprep.subr.mxu0 0.0
      %1044 = vmatpush2.msra.mxu0 0.0
      %1045 = vmatprep.subr.mxu0 0.0
      %1046 = vmatpush2.msra.mxu0 0.0
      %1047 = vmatprep.subr.mxu0 0.0
      %1048 = vmatpush2.msra.mxu0 0.0
      %1049 = vmatprep.subr.mxu0 0.0
      %1050 = vmatpush2.msra.mxu0 0.0
      %1051 = vmatprep.subr.mxu0 0.0
      %1052 = vmatpush2.msra.mxu0 0.0
      %1053 = vmatprep.subr.mxu0 0.0
      %1054 = vmatpush2.msra.mxu0 0.0
      %1055 = vmatprep.subr.mxu0 0.0
      %1056 = vmatpush2.msra.mxu0 0.0
      %1057 = vmatprep.subr.mxu0 0.0
      %1058 = vmatpush2.msra.mxu0 0.0
      %1059 = vmatprep.subr.mxu0 0.0
      %1060 = vmatpush2.msra.mxu0 0.0
      %1061 = vmatprep.subr.mxu0 0.0
      %1062 = vmatpush2.msra.mxu0 0.0
      %1063 = vmatprep.subr.mxu0 0.0
      %1064 = vmatpush2.msra.mxu0 0.0
      %1065 = vmatprep.subr.mxu0 0.0
      %1066 = vmatpush2.msra.mxu0 0.0
      %1067 = vmatprep.subr.mxu0 0.0
      %1068 = vmatpush2.msra.mxu0 0.0
      %1069 = vmatprep.subr.mxu0 0.0
      %1070 = vmatpush2.msra.mxu0 0.0
      %1071 = vmatprep.subr.mxu0 0.0
      %1072 = vmatpush2.msra.mxu0 0.0
      %1073 = vmatprep.subr.mxu0 0.0
      %1074 = vmatpush2.msra.mxu0 0.0
      %1075 = vmatprep.mubr.f32.mxu0 0.0
      %1076 = vmatmul.mubr.f32.gmra.mxu0 %v1009
      %v1077 = vpop.f32.mrf.mxu0
      %v1078 = vadd.f32 0.0, %v1077
      %v1079 = vpop.f32.mrf.mxu0
      %v1080 = vadd.f32 0.0, %v1079
      %1081 = vdwg.mxu0
      %vm1082 = vcmp.ge.f32.partialorder %v1078, 0.0
      %vm1083 = vcmp.ge.f32.partialorder %v1080, 0.0
      %v1084 = vmul.f32 %v1078, 0.01
      %v1085 = vmul.f32 %v1080, 0.01
      %v1086 = vsel %vm1082, %v1078, %v1084
      %v1087 = vsel %vm1083, %v1080, %v1085
      %v1088 = vld [vmem:[%s1 + $0x78] sm:$0xff]
      %1091 = vrot.lane.b32.xlu0 %v1086, 127
      %v1092 = vpop.permute.xlu0 %1091
      %1093 = vrot.lane.b32.xlu0 %v1087, 127
      %v1094 = vpop.permute.xlu0 %1093
      %v1095 = vsel %vm191, %v1092, %v1094
      %1098 = vrot.lane.b32.xlu0 %v1086, 126
      %v1099 = vpop.permute.xlu0 %1098
      %1100 = vrot.lane.b32.xlu0 %v1087, 126
      %v1101 = vpop.permute.xlu0 %1100
      %v1102 = vsel %vm199, %v1099, %v1101
      %1105 = vrot.lane.b32.xlu0 %v1086, 125
      %v1106 = vpop.permute.xlu0 %1105
      %1107 = vrot.lane.b32.xlu0 %v1087, 125
      %v1108 = vpop.permute.xlu0 %1107
      %v1109 = vsel %vm207, %v1106, %v1108
      %1112 = vrot.lane.b32.xlu0 %v1086, 124
      %v1113 = vpop.permute.xlu0 %1112
      %1114 = vrot.lane.b32.xlu0 %v1087, 124
      %v1115 = vpop.permute.xlu0 %1114
      %v1116 = vsel %vm215, %v1113, %v1115
      %1120 = vset.pattern.permute.xlu0 40
      %1121 = vperm.xlu0 %1120, %v1088
      %v1122 = vpop.permute.xlu0 %1121
      %v1124 = vsel %vm224, %v1088, 0
      %1126 = vmatprep.subr.mxu0 0.0
      %1127 = vmatpush1.msra.mxu0 0.0
      %1128 = vmatprep.subr.mxu0 0.0
      %1129 = vmatpush1.msra.mxu0 0.0
      %1130 = vmatprep.subr.mxu0 0.0
      %1131 = vmatpush1.msra.mxu0 0.0
      %1132 = vmatprep.subr.mxu0 0.0
      %1133 = vmatpush1.msra.mxu0 0.0
      %1134 = vmatprep.subr.mxu0 0.0
      %1135 = vmatpush1.msra.mxu0 0.0
      %1136 = vmatprep.subr.mxu0 0.0
      %1137 = vmatpush1.msra.mxu0 0.0
      %1138 = vmatprep.subr.mxu0 0.0
      %1139 = vmatpush1.msra.mxu0 0.0
      %1140 = vmatprep.subr.mxu0 0.0
      %1141 = vmatpush1.msra.mxu0 0.0
      %1142 = vmatprep.subr.mxu0 0.0
      %1143 = vmatpush1.msra.mxu0 0.0
      %1144 = vmatprep.subr.mxu0 0.0
      %1145 = vmatpush1.msra.mxu0 0.0
      %1146 = vmatprep.subr.mxu0 0.0
      %1147 = vmatpush1.msra.mxu0 0.0
      %1148 = vmatprep.subr.mxu0 %v1115
      %1149 = vmatpush1.msra.mxu0 %v1116
      %1150 = vmatprep.subr.mxu0 %v1108
      %1151 = vmatpush1.msra.mxu0 %v1109
      %1152 = vmatprep.subr.mxu0 %v1101
      %1153 = vmatpush1.msra.mxu0 %v1102
      %1154 = vmatprep.subr.mxu0 %v1094
      %1155 = vmatpush1.msra.mxu0 %v1095
      %1156 = vmatprep.subr.mxu0 %v1087
      %1157 = vmatpush1.msra.mxu0 %v1086
      %1158 = vmatprep.subr.mxu0 0.0
      %1159 = vmatpush2.msra.mxu0 0.0
      %1160 = vmatprep.subr.mxu0 0.0
      %1161 = vmatpush2.msra.mxu0 0.0
      %1162 = vmatprep.subr.mxu0 0.0
      %1163 = vmatpush2.msra.mxu0 0.0
      %1164 = vmatprep.subr.mxu0 0.0
      %1165 = vmatpush2.msra.mxu0 0.0
      %1166 = vmatprep.subr.mxu0 0.0
      %1167 = vmatpush2.msra.mxu0 0.0
      %1168 = vmatprep.subr.mxu0 0.0
      %1169 = vmatpush2.msra.mxu0 0.0
      %1170 = vmatprep.subr.mxu0 0.0
      %1171 = vmatpush2.msra.mxu0 0.0
      %1172 = vmatprep.subr.mxu0 0.0
      %1173 = vmatpush2.msra.mxu0 0.0
      %1174 = vmatprep.subr.mxu0 0.0
      %1175 = vmatpush2.msra.mxu0 0.0
      %1176 = vmatprep.subr.mxu0 0.0
      %1177 = vmatpush2.msra.mxu0 0.0
      %1178 = vmatprep.subr.mxu0 0.0
      %1179 = vmatpush2.msra.mxu0 0.0
      %1180 = vmatprep.subr.mxu0 0.0
      %1181 = vmatpush2.msra.mxu0 0.0
      %1182 = vmatprep.subr.mxu0 0.0
      %1183 = vmatpush2.msra.mxu0 0.0
      %1184 = vmatprep.subr.mxu0 0.0
      %1185 = vmatpush2.msra.mxu0 0.0
      %1186 = vmatprep.subr.mxu0 0.0
      %1187 = vmatpush2.msra.mxu0 0.0
      %1188 = vmatprep.subr.mxu0 0.0
      %1189 = vmatpush2.msra.mxu0 0.0
      %1190 = vmatprep.mubr.f32.mxu0 0.0
      %1191 = vmatmul.mubr.f32.gmra.mxu0 %v1124
      %v1192 = vpop.f32.mrf.mxu0
      %v1193 = vadd.f32 %v1122, %v1192
      %v1194 = vpop.f32.mrf.mxu0
      %v1195 = vadd.f32 %v1122, %v1194
      %1196 = vdwg.mxu0
      %v1197 = vld [vmem:[%s1 + $0x6d8] sm:$0xff]
      %v1198 = vld [vmem:[%s1 + $0x6e0] sm:$0xff]
      %v1199 = vld [vmem:[%s1 + $0x6e8] sm:$0xff]
      %v1200 = vld [vmem:[%s1 + $0x6f0] sm:$0xff]
      %v1201 = vld [vmem:[%s1 + $0x6f8] sm:$0xff]
      %v1202 = vld [vmem:[%s1 + $0x700] sm:$0xff]
      %v1203 = vld [vmem:[%s1 + $0x708] sm:$0xff]
      %v1204 = vld [vmem:[%s1 + $0x710] sm:$0xff]
      %v1205 = vld [vmem:[%s1 + $0x718] sm:$0xff]
      %v1206 = vld [vmem:[%s1 + $0x720] sm:$0xff]
      %v1207 = vld [vmem:[%s1 + $0x728] sm:$0xff]
      %v1208 = vld [vmem:[%s1 + $0x730] sm:$0xff]
      %v1209 = vld [vmem:[%s1 + $0x738] sm:$0xff]
      %v1210 = vld [vmem:[%s1 + $0x740] sm:$0xff]
      %v1211 = vld [vmem:[%s1 + $0x748] sm:$0xff]
      %v1212 = vld [vmem:[%s1 + $0x750] sm:$0xff]
      %v1213 = vld [vmem:[%s1 + $0x758] sm:$0xff]
      %v1214 = vld [vmem:[%s1 + $0x760] sm:$0xff]
      %v1215 = vld [vmem:[%s1 + $0x768] sm:$0xff]
      %v1216 = vld [vmem:[%s1 + $0x770] sm:$0xff]
      %v1217 = vld [vmem:[%s1 + $0x778] sm:$0xff]
      %v1218 = vld [vmem:[%s1 + $0x780] sm:$0xff]
      %v1219 = vld [vmem:[%s1 + $0x788] sm:$0xff]
      %v1220 = vld [vmem:[%s1 + $0x790] sm:$0xff]
      %v1221 = vld [vmem:[%s1 + $0x798] sm:$0xff]
      %v1222 = vld [vmem:[%s1 + $0x7a0] sm:$0xff]
      %v1223 = vld [vmem:[%s1 + $0x7a8] sm:$0xff]
      %v1224 = vld [vmem:[%s1 + $0x7b0] sm:$0xff]
      %v1225 = vld [vmem:[%s1 + $0x7b8] sm:$0xff]
      %v1226 = vld [vmem:[%s1 + $0x7c0] sm:$0xff]
      %v1227 = vld [vmem:[%s1 + $0x7c8] sm:$0xff]
      %v1228 = vld [vmem:[%s1 + $0x7d0] sm:$0xff]
      %v1229 = vld [vmem:[%s1 + $0x7d8] sm:$0xff]
      %v1230 = vld [vmem:[%s1 + $0x7e0] sm:$0xff]
      %v1231 = vld [vmem:[%s1 + $0x7e8] sm:$0xff]
      %v1232 = vld [vmem:[%s1 + $0x7f0] sm:$0xff]
      %v1233 = vld [vmem:[%s1 + $0x7f8] sm:$0xff]
      %v1234 = vld [vmem:[%s1 + $0x800] sm:$0xff]
      %v1235 = vld [vmem:[%s1 + $0x808] sm:$0xff]
      %v1236 = vld [vmem:[%s1 + $0x810] sm:$0xff]
      %v1237 = vld [vmem:[%s1 + $0x818] sm:$0xff]
      %v1238 = vld [vmem:[%s1 + $0x820] sm:$0xff]
      %v1239 = vld [vmem:[%s1 + $0x828] sm:$0xff]
      %v1240 = vld [vmem:[%s1 + $0x830] sm:$0xff]
      %v1241 = vld [vmem:[%s1 + $0x838] sm:$0xff]
      %v1242 = vld [vmem:[%s1 + $0x840] sm:$0xff]
      %v1243 = vld [vmem:[%s1 + $0x848] sm:$0xff]
      %v1244 = vld [vmem:[%s1 + $0x850] sm:$0xff]
      %v1245 = vld [vmem:[%s1 + $0x858] sm:$0xf]
      %v1246 = vld [vmem:[%s1 + $0x860] sm:$0xf]
      %v1247 = vld [vmem:[%s1 + $0x868] sm:$0xf]
      %vm1248 = vcmask 31744
      %v1250 = vsel %vm1248, %v1195, 0
      %v1253 = vsel %vm333, %v1245, 0
      %v1256 = vsel %vm333, %v1246, 0
      %v1259 = vsel %vm333, %v1247, 0
      %1261 = vmatprep.subr.mxu0 %v1243
      %1262 = vmatpush1.msra.mxu0 %v1242
      %1263 = vmatprep.subr.mxu0 %v1240
      %1264 = vmatpush1.msra.mxu0 %v1239
      %1265 = vmatprep.subr.mxu0 %v1237
      %1266 = vmatpush1.msra.mxu0 %v1236
      %1267 = vmatprep.subr.mxu0 %v1234
      %1268 = vmatpush1.msra.mxu0 %v1233
      %1269 = vmatprep.subr.mxu0 %v1231
      %1270 = vmatpush1.msra.mxu0 %v1230
      %1271 = vmatprep.subr.mxu0 %v1228
      %1272 = vmatpush1.msra.mxu0 %v1227
      %1273 = vmatprep.subr.mxu0 %v1225
      %1274 = vmatpush1.msra.mxu0 %v1224
      %1275 = vmatprep.subr.mxu0 %v1222
      %1276 = vmatpush1.msra.mxu0 %v1221
      %1277 = vmatprep.subr.mxu0 %v1219
      %1278 = vmatpush1.msra.mxu0 %v1218
      %1279 = vmatprep.subr.mxu0 %v1216
      %1280 = vmatpush1.msra.mxu0 %v1215
      %1281 = vmatprep.subr.mxu0 %v1213
      %1282 = vmatpush1.msra.mxu0 %v1212
      %1283 = vmatprep.subr.mxu0 %v1210
      %1284 = vmatpush1.msra.mxu0 %v1209
      %1285 = vmatprep.subr.mxu0 %v1207
      %1286 = vmatpush1.msra.mxu0 %v1206
      %1287 = vmatprep.subr.mxu0 %v1204
      %1288 = vmatpush1.msra.mxu0 %v1203
      %1289 = vmatprep.subr.mxu0 %v1201
      %1290 = vmatpush1.msra.mxu0 %v1200
      %1291 = vmatprep.subr.mxu0 %v1198
      %1292 = vmatpush1.msra.mxu0 %v1197
      %1293 = vmatprep.subr.mxu0 0.0
      %1294 = vmatpush2.msra.mxu0 0.0
      %1295 = vmatprep.subr.mxu0 0.0
      %1296 = vmatpush2.msra.mxu0 0.0
      %1297 = vmatprep.subr.mxu0 0.0
      %1298 = vmatpush2.msra.mxu0 0.0
      %1299 = vmatprep.subr.mxu0 0.0
      %1300 = vmatpush2.msra.mxu0 0.0
      %1301 = vmatprep.subr.mxu0 0.0
      %1302 = vmatpush2.msra.mxu0 0.0
      %1303 = vmatprep.subr.mxu0 0.0
      %1304 = vmatpush2.msra.mxu0 0.0
      %1305 = vmatprep.subr.mxu0 0.0
      %1306 = vmatpush2.msra.mxu0 0.0
      %1307 = vmatprep.subr.mxu0 0.0
      %1308 = vmatpush2.msra.mxu0 0.0
      %1309 = vmatprep.subr.mxu0 0.0
      %1310 = vmatpush2.msra.mxu0 0.0
      %1311 = vmatprep.subr.mxu0 0.0
      %1312 = vmatpush2.msra.mxu0 0.0
      %1313 = vmatprep.subr.mxu0 0.0
      %1314 = vmatpush2.msra.mxu0 0.0
      %1315 = vmatprep.subr.mxu0 0.0
      %1316 = vmatpush2.msra.mxu0 0.0
      %1317 = vmatprep.subr.mxu0 0.0
      %1318 = vmatpush2.msra.mxu0 0.0
      %1319 = vmatprep.subr.mxu0 0.0
      %1320 = vmatpush2.msra.mxu0 0.0
      %1321 = vmatprep.subr.mxu0 0.0
      %1322 = vmatpush2.msra.mxu0 0.0
      %1323 = vmatprep.subr.mxu0 %v1256
      %1324 = vmatpush2.msra.mxu0 %v1253
      %1325 = vmatprep.mubr.f32.mxu0 %v1250
      %1326 = vmatmul.mubr.f32.gmra.mxu0 %v1193
      %v1327 = vpop.f32.mrf.mxu0
      %v1328 = vadd.f32 0.0, %v1327
      %v1329 = vpop.f32.mrf.mxu0
      %v1330 = vadd.f32 0.0, %v1329
      %1331 = vdwg.mxu0
      %1332 = vmatprep.subr.mxu0 0.0
      %1333 = vmatpush1.msra.mxu0 %v1244
      %1334 = vmatprep.subr.mxu0 0.0
      %1335 = vmatpush1.msra.mxu0 %v1241
      %1336 = vmatprep.subr.mxu0 0.0
      %1337 = vmatpush1.msra.mxu0 %v1238
      %1338 = vmatprep.subr.mxu0 0.0
      %1339 = vmatpush1.msra.mxu0 %v1235
      %1340 = vmatprep.subr.mxu0 0.0
      %1341 = vmatpush1.msra.mxu0 %v1232
      %1342 = vmatprep.subr.mxu0 0.0
      %1343 = vmatpush1.msra.mxu0 %v1229
      %1344 = vmatprep.subr.mxu0 0.0
      %1345 = vmatpush1.msra.mxu0 %v1226
      %1346 = vmatprep.subr.mxu0 0.0
      %1347 = vmatpush1.msra.mxu0 %v1223
      %1348 = vmatprep.subr.mxu0 0.0
      %1349 = vmatpush1.msra.mxu0 %v1220
      %1350 = vmatprep.subr.mxu0 0.0
      %1351 = vmatpush1.msra.mxu0 %v1217
      %1352 = vmatprep.subr.mxu0 0.0
      %1353 = vmatpush1.msra.mxu0 %v1214
      %1354 = vmatprep.subr.mxu0 0.0
      %1355 = vmatpush1.msra.mxu0 %v1211
      %1356 = vmatprep.subr.mxu0 0.0
      %1357 = vmatpush1.msra.mxu0 %v1208
      %1358 = vmatprep.subr.mxu0 0.0
      %1359 = vmatpush1.msra.mxu0 %v1205
      %1360 = vmatprep.subr.mxu0 0.0
      %1361 = vmatpush1.msra.mxu0 %v1202
      %1362 = vmatprep.subr.mxu0 0.0
      %1363 = vmatpush1.msra.mxu0 %v1199
      %1364 = vmatprep.subr.mxu0 0.0
      %1365 = vmatpush2.msra.mxu0 0.0
      %1366 = vmatprep.subr.mxu0 0.0
      %1367 = vmatpush2.msra.mxu0 0.0
      %1368 = vmatprep.subr.mxu0 0.0
      %1369 = vmatpush2.msra.mxu0 0.0
      %1370 = vmatprep.subr.mxu0 0.0
      %1371 = vmatpush2.msra.mxu0 0.0
      %1372 = vmatprep.subr.mxu0 0.0
      %1373 = vmatpush2.msra.mxu0 0.0
      %1374 = vmatprep.subr.mxu0 0.0
      %1375 = vmatpush2.msra.mxu0 0.0
      %1376 = vmatprep.subr.mxu0 0.0
      %1377 = vmatpush2.msra.mxu0 0.0
      %1378 = vmatprep.subr.mxu0 0.0
      %1379 = vmatpush2.msra.mxu0 0.0
      %1380 = vmatprep.subr.mxu0 0.0
      %1381 = vmatpush2.msra.mxu0 0.0
      %1382 = vmatprep.subr.mxu0 0.0
      %1383 = vmatpush2.msra.mxu0 0.0
      %1384 = vmatprep.subr.mxu0 0.0
      %1385 = vmatpush2.msra.mxu0 0.0
      %1386 = vmatprep.subr.mxu0 0.0
      %1387 = vmatpush2.msra.mxu0 0.0
      %1388 = vmatprep.subr.mxu0 0.0
      %1389 = vmatpush2.msra.mxu0 0.0
      %1390 = vmatprep.subr.mxu0 0.0
      %1391 = vmatpush2.msra.mxu0 0.0
      %1392 = vmatprep.subr.mxu0 0.0
      %1393 = vmatpush2.msra.mxu0 0.0
      %1394 = vmatprep.subr.mxu0 0.0
      %1395 = vmatpush2.msra.mxu0 %v1259
      %1396 = vmatprep.mubr.f32.mxu0 %v1250
      %1397 = vmatmul.mubr.f32.gmra.mxu0 %v1193
      %v1398 = vpop.f32.mrf.mxu0
      %v1399 = vadd.f32 0.0, %v1398
      %v1400 = vpop.f32.mrf.mxu0
      %1401 = vdwg.mxu0
      %vm1402 = vcmp.ge.f32.partialorder %v1328, 0.0
      %vm1403 = vcmp.ge.f32.partialorder %v1330, 0.0
      %vm1404 = vcmp.ge.f32.partialorder %v1399, 0.0
      %v1405 = vmul.f32 %v1328, 0.01
      %v1406 = vmul.f32 %v1330, 0.01
      %v1407 = vmul.f32 %v1399, 0.01
      %v1408 = vsel %vm1402, %v1328, %v1405
      %v1409 = vsel %vm1403, %v1330, %v1406
      %v1410 = vsel %vm1404, %v1399, %v1407
      %v1411 = vld [vmem:[%s1 + $0x90] sm:$0xff]
      %1415 = vrot.lane.b32.xlu0 %v1408, 127
      %v1416 = vpop.permute.xlu0 %1415
      %1417 = vrot.lane.b32.xlu0 %v1409, 127
      %v1418 = vpop.permute.xlu0 %1417
      %1419 = vrot.lane.b32.xlu0 %v1410, 127
      %v1420 = vpop.permute.xlu0 %1419
      %v1421 = vsel %vm191, %v1416, %v1418
      %v1422 = vsel %vm191, %v1418, %v1420
      %1426 = vrot.lane.b32.xlu0 %v1408, 126
      %v1427 = vpop.permute.xlu0 %1426
      %1428 = vrot.lane.b32.xlu0 %v1409, 126
      %v1429 = vpop.permute.xlu0 %1428
      %1430 = vrot.lane.b32.xlu0 %v1410, 126
      %v1431 = vpop.permute.xlu0 %1430
      %v1432 = vsel %vm199, %v1427, %v1429
      %v1433 = vsel %vm199, %v1429, %v1431
      %1437 = vrot.lane.b32.xlu0 %v1408, 125
      %v1438 = vpop.permute.xlu0 %1437
      %1439 = vrot.lane.b32.xlu0 %v1409, 125
      %v1440 = vpop.permute.xlu0 %1439
      %1441 = vrot.lane.b32.xlu0 %v1410, 125
      %v1442 = vpop.permute.xlu0 %1441
      %v1443 = vsel %vm207, %v1438, %v1440
      %v1444 = vsel %vm207, %v1440, %v1442
      %1448 = vrot.lane.b32.xlu0 %v1408, 124
      %v1449 = vpop.permute.xlu0 %1448
      %1450 = vrot.lane.b32.xlu0 %v1409, 124
      %v1451 = vpop.permute.xlu0 %1450
      %1452 = vrot.lane.b32.xlu0 %v1410, 124
      %v1453 = vpop.permute.xlu0 %1452
      %v1454 = vsel %vm215, %v1449, %v1451
      %v1455 = vsel %vm215, %v1451, %v1453
      %1460 = vset.pattern.permute.xlu0 40
      %1461 = vperm.xlu0 %1460, %v1411
      %v1462 = vpop.permute.xlu0 %1461
      %v1464 = vsel %vm224, %v1411, 0
      %1466 = vmatprep.subr.mxu0 0.0
      %1467 = vmatpush1.msra.mxu0 0.0
      %1468 = vmatprep.subr.mxu0 0.0
      %1469 = vmatpush1.msra.mxu0 0.0
      %1470 = vmatprep.subr.mxu0 0.0
      %1471 = vmatpush1.msra.mxu0 0.0
      %1472 = vmatprep.subr.mxu0 0.0
      %1473 = vmatpush1.msra.mxu0 0.0
      %1474 = vmatprep.subr.mxu0 0.0
      %1475 = vmatpush1.msra.mxu0 0.0
      %1476 = vmatprep.subr.mxu0 0.0
      %1477 = vmatpush1.msra.mxu0 0.0
      %1478 = vmatprep.subr.mxu0 0.0
      %1479 = vmatpush1.msra.mxu0 0.0
      %1480 = vmatprep.subr.mxu0 0.0
      %1481 = vmatpush1.msra.mxu0 0.0
      %1482 = vmatprep.subr.mxu0 0.0
      %1483 = vmatpush1.msra.mxu0 0.0
      %1484 = vmatprep.subr.mxu0 0.0
      %1485 = vmatpush1.msra.mxu0 0.0
      %1486 = vmatprep.subr.mxu0 0.0
      %1487 = vmatpush1.msra.mxu0 0.0
      %1488 = vmatprep.subr.mxu0 %v1455
      %1489 = vmatpush1.msra.mxu0 %v1454
      %1490 = vmatprep.subr.mxu0 %v1444
      %1491 = vmatpush1.msra.mxu0 %v1443
      %1492 = vmatprep.subr.mxu0 %v1433
      %1493 = vmatpush1.msra.mxu0 %v1432
      %1494 = vmatprep.subr.mxu0 %v1422
      %1495 = vmatpush1.msra.mxu0 %v1421
      %1496 = vmatprep.subr.mxu0 %v1409
      %1497 = vmatpush1.msra.mxu0 %v1408
      %1498 = vmatprep.subr.mxu0 0.0
      %1499 = vmatpush2.msra.mxu0 0.0
      %1500 = vmatprep.subr.mxu0 0.0
      %1501 = vmatpush2.msra.mxu0 0.0
      %1502 = vmatprep.subr.mxu0 0.0
      %1503 = vmatpush2.msra.mxu0 0.0
      %1504 = vmatprep.subr.mxu0 0.0
      %1505 = vmatpush2.msra.mxu0 0.0
      %1506 = vmatprep.subr.mxu0 0.0
      %1507 = vmatpush2.msra.mxu0 0.0
      %1508 = vmatprep.subr.mxu0 0.0
      %1509 = vmatpush2.msra.mxu0 0.0
      %1510 = vmatprep.subr.mxu0 0.0
      %1511 = vmatpush2.msra.mxu0 0.0
      %1512 = vmatprep.subr.mxu0 0.0
      %1513 = vmatpush2.msra.mxu0 0.0
      %1514 = vmatprep.subr.mxu0 0.0
      %1515 = vmatpush2.msra.mxu0 0.0
      %1516 = vmatprep.subr.mxu0 0.0
      %1517 = vmatpush2.msra.mxu0 0.0
      %1518 = vmatprep.subr.mxu0 0.0
      %1519 = vmatpush2.msra.mxu0 0.0
      %1520 = vmatprep.subr.mxu0 0.0
      %1521 = vmatpush2.msra.mxu0 0.0
      %1522 = vmatprep.subr.mxu0 0.0
      %1523 = vmatpush2.msra.mxu0 0.0
      %1524 = vmatprep.subr.mxu0 0.0
      %1525 = vmatpush2.msra.mxu0 0.0
      %1526 = vmatprep.subr.mxu0 0.0
      %1527 = vmatpush2.msra.mxu0 0.0
      %1528 = vmatprep.subr.mxu0 0.0
      %1529 = vmatpush2.msra.mxu0 0.0
      %1530 = vmatprep.mubr.f32.mxu0 0.0
      %1531 = vmatmul.mubr.f32.gmra.mxu0 %v1464
      %v1532 = vpop.f32.mrf.mxu0
      %v1533 = vadd.f32 %v1462, %v1532
      %v1534 = vpop.f32.mrf.mxu0
      %v1535 = vadd.f32 %v1462, %v1534
      %1536 = vdwg.mxu0
      %1537 = vmatprep.subr.mxu0 0.0
      %1538 = vmatpush1.msra.mxu0 0.0
      %1539 = vmatprep.subr.mxu0 0.0
      %1540 = vmatpush1.msra.mxu0 0.0
      %1541 = vmatprep.subr.mxu0 0.0
      %1542 = vmatpush1.msra.mxu0 0.0
      %1543 = vmatprep.subr.mxu0 0.0
      %1544 = vmatpush1.msra.mxu0 0.0
      %1545 = vmatprep.subr.mxu0 0.0
      %1546 = vmatpush1.msra.mxu0 0.0
      %1547 = vmatprep.subr.mxu0 0.0
      %1548 = vmatpush1.msra.mxu0 0.0
      %1549 = vmatprep.subr.mxu0 0.0
      %1550 = vmatpush1.msra.mxu0 0.0
      %1551 = vmatprep.subr.mxu0 0.0
      %1552 = vmatpush1.msra.mxu0 0.0
      %1553 = vmatprep.subr.mxu0 0.0
      %1554 = vmatpush1.msra.mxu0 0.0
      %1555 = vmatprep.subr.mxu0 0.0
      %1556 = vmatpush1.msra.mxu0 0.0
      %1557 = vmatprep.subr.mxu0 0.0
      %1558 = vmatpush1.msra.mxu0 0.0
      %1559 = vmatprep.subr.mxu0 0.0
      %1560 = vmatpush1.msra.mxu0 %v1453
      %1561 = vmatprep.subr.mxu0 0.0
      %1562 = vmatpush1.msra.mxu0 %v1442
      %1563 = vmatprep.subr.mxu0 0.0
      %1564 = vmatpush1.msra.mxu0 %v1431
      %1565 = vmatprep.subr.mxu0 0.0
      %1566 = vmatpush1.msra.mxu0 %v1420
      %1567 = vmatprep.subr.mxu0 0.0
      %1568 = vmatpush1.msra.mxu0 %v1410
      %1569 = vmatprep.subr.mxu0 0.0
      %1570 = vmatpush2.msra.mxu0 0.0
      %1571 = vmatprep.subr.mxu0 0.0
      %1572 = vmatpush2.msra.mxu0 0.0
      %1573 = vmatprep.subr.mxu0 0.0
      %1574 = vmatpush2.msra.mxu0 0.0
      %1575 = vmatprep.subr.mxu0 0.0
      %1576 = vmatpush2.msra.mxu0 0.0
      %1577 = vmatprep.subr.mxu0 0.0
      %1578 = vmatpush2.msra.mxu0 0.0
      %1579 = vmatprep.subr.mxu0 0.0
      %1580 = vmatpush2.msra.mxu0 0.0
      %1581 = vmatprep.subr.mxu0 0.0
      %1582 = vmatpush2.msra.mxu0 0.0
      %1583 = vmatprep.subr.mxu0 0.0
      %1584 = vmatpush2.msra.mxu0 0.0
      %1585 = vmatprep.subr.mxu0 0.0
      %1586 = vmatpush2.msra.mxu0 0.0
      %1587 = vmatprep.subr.mxu0 0.0
      %1588 = vmatpush2.msra.mxu0 0.0
      %1589 = vmatprep.subr.mxu0 0.0
      %1590 = vmatpush2.msra.mxu0 0.0
      %1591 = vmatprep.subr.mxu0 0.0
      %1592 = vmatpush2.msra.mxu0 0.0
      %1593 = vmatprep.subr.mxu0 0.0
      %1594 = vmatpush2.msra.mxu0 0.0
      %1595 = vmatprep.subr.mxu0 0.0
      %1596 = vmatpush2.msra.mxu0 0.0
      %1597 = vmatprep.subr.mxu0 0.0
      %1598 = vmatpush2.msra.mxu0 0.0
      %1599 = vmatprep.subr.mxu0 0.0
      %1600 = vmatpush2.msra.mxu0 0.0
      %1601 = vmatprep.mubr.f32.mxu0 0.0
      %1602 = vmatmul.mubr.f32.gmra.mxu0 %v1464
      %v1603 = vpop.f32.mrf.mxu0
      %v1604 = vadd.f32 %v1462, %v1603
      %v1605 = vpop.f32.mrf.mxu0
      %1606 = vdwg.mxu0
      %v1607 = vld [vmem:[%s1 + $0x870] sm:$0xff]
      %v1608 = vld [vmem:[%s1 + $0x878] sm:$0xff]
      %v1609 = vld [vmem:[%s1 + $0x888] sm:$0xff]
      %v1610 = vld [vmem:[%s1 + $0x890] sm:$0xff]
      %v1611 = vld [vmem:[%s1 + $0x8a0] sm:$0xff]
      %v1612 = vld [vmem:[%s1 + $0x8a8] sm:$0xff]
      %v1613 = vld [vmem:[%s1 + $0x8b8] sm:$0xff]
      %v1614 = vld [vmem:[%s1 + $0x8c0] sm:$0xff]
      %v1615 = vld [vmem:[%s1 + $0x8d0] sm:$0xff]
      %v1616 = vld [vmem:[%s1 + $0x8d8] sm:$0xff]
      %v1617 = vld [vmem:[%s1 + $0x8e8] sm:$0xff]
      %v1618 = vld [vmem:[%s1 + $0x8f0] sm:$0xff]
      %v1619 = vld [vmem:[%s1 + $0x900] sm:$0xff]
      %v1620 = vld [vmem:[%s1 + $0x908] sm:$0xff]
      %v1621 = vld [vmem:[%s1 + $0x918] sm:$0xff]
      %v1622 = vld [vmem:[%s1 + $0x920] sm:$0xff]
      %v1623 = vld [vmem:[%s1 + $0x930] sm:$0xff]
      %v1624 = vld [vmem:[%s1 + $0x938] sm:$0xff]
      %v1625 = vld [vmem:[%s1 + $0x948] sm:$0xff]
      %v1626 = vld [vmem:[%s1 + $0x950] sm:$0xff]
      %v1627 = vld [vmem:[%s1 + $0x960] sm:$0xff]
      %v1628 = vld [vmem:[%s1 + $0x968] sm:$0xff]
      %v1629 = vld [vmem:[%s1 + $0x978] sm:$0xff]
      %v1630 = vld [vmem:[%s1 + $0x980] sm:$0xff]
      %v1631 = vld [vmem:[%s1 + $0x990] sm:$0xff]
      %v1632 = vld [vmem:[%s1 + $0x998] sm:$0xff]
      %v1633 = vld [vmem:[%s1 + $0x9a8] sm:$0xff]
      %v1634 = vld [vmem:[%s1 + $0x9b0] sm:$0xff]
      %v1635 = vld [vmem:[%s1 + $0x9c0] sm:$0xff]
      %v1636 = vld [vmem:[%s1 + $0x9c8] sm:$0xff]
      %v1637 = vld [vmem:[%s1 + $0x9d8] sm:$0xff]
      %v1638 = vld [vmem:[%s1 + $0x9e0] sm:$0xff]
      %v1639 = vld [vmem:[%s1 + $0x9f0] sm:$0xff]
      %v1640 = vld [vmem:[%s1 + $0x9f8] sm:$0xff]
      %v1641 = vld [vmem:[%s1 + $0xa08] sm:$0xff]
      %v1642 = vld [vmem:[%s1 + $0xa10] sm:$0xff]
      %v1643 = vld [vmem:[%s1 + $0xa20] sm:$0xff]
      %v1644 = vld [vmem:[%s1 + $0xa28] sm:$0xff]
      %v1645 = vld [vmem:[%s1 + $0xa38] sm:$0xff]
      %v1646 = vld [vmem:[%s1 + $0xa40] sm:$0xff]
      %v1647 = vld [vmem:[%s1 + $0xa50] sm:$0xff]
      %v1648 = vld [vmem:[%s1 + $0xa58] sm:$0xff]
      %v1649 = vld [vmem:[%s1 + $0xa68] sm:$0xff]
      %v1650 = vld [vmem:[%s1 + $0xa70] sm:$0xff]
      %v1651 = vld [vmem:[%s1 + $0xa80] sm:$0xff]
      %v1652 = vld [vmem:[%s1 + $0xa88] sm:$0xff]
      %v1653 = vld [vmem:[%s1 + $0xa98] sm:$0xff]
      %v1654 = vld [vmem:[%s1 + $0xaa0] sm:$0xff]
      %v1655 = vld [vmem:[%s1 + $0xab0] sm:$0xff]
      %v1656 = vld [vmem:[%s1 + $0xab8] sm:$0xff]
      %v1657 = vld [vmem:[%s1 + $0xac8] sm:$0xff]
      %v1658 = vld [vmem:[%s1 + $0xad0] sm:$0xff]
      %v1659 = vld [vmem:[%s1 + $0xae0] sm:$0xff]
      %v1660 = vld [vmem:[%s1 + $0xae8] sm:$0xff]
      %v1661 = vld [vmem:[%s1 + $0xaf8] sm:$0xff]
      %v1662 = vld [vmem:[%s1 + $0xb00] sm:$0xff]
      %v1663 = vld [vmem:[%s1 + $0xb10] sm:$0xff]
      %v1664 = vld [vmem:[%s1 + $0xb18] sm:$0xff]
      %v1665 = vld [vmem:[%s1 + $0xb28] sm:$0xff]
      %v1666 = vld [vmem:[%s1 + $0xb30] sm:$0xff]
      %v1667 = vld [vmem:[%s1 + $0xb40] sm:$0xff]
      %v1668 = vld [vmem:[%s1 + $0xb48] sm:$0xff]
      %v1669 = vld [vmem:[%s1 + $0xb58] sm:$0xff]
      %v1670 = vld [vmem:[%s1 + $0xb60] sm:$0xff]
      %v1671 = vld [vmem:[%s1 + $0xb70] sm:$0xff]
      %v1672 = vld [vmem:[%s1 + $0xb78] sm:$0xff]
      %v1673 = vld [vmem:[%s1 + $0xb88] sm:$0xf]
      %v1674 = vld [vmem:[%s1 + $0xb90] sm:$0xf]
      %vm1675 = vcmask 97280
      %v1677 = vsel %vm1675, %v1604, 0
      %v1680 = vsel %vm333, %v1673, 0
      %v1683 = vsel %vm333, %v1674, 0
      %1685 = vmatprep.subr.mxu0 %v1638
      %1686 = vmatpush1.msra.mxu0 %v1637
      %1687 = vmatprep.subr.mxu0 %v1636
      %1688 = vmatpush1.msra.mxu0 %v1635
      %1689 = vmatprep.subr.mxu0 %v1634
      %1690 = vmatpush1.msra.mxu0 %v1633
      %1691 = vmatprep.subr.mxu0 %v1632
      %1692 = vmatpush1.msra.mxu0 %v1631
      %1693 = vmatprep.subr.mxu0 %v1630
      %1694 = vmatpush1.msra.mxu0 %v1629
      %1695 = vmatprep.subr.mxu0 %v1628
      %1696 = vmatpush1.msra.mxu0 %v1627
      %1697 = vmatprep.subr.mxu0 %v1626
      %1698 = vmatpush1.msra.mxu0 %v1625
      %1699 = vmatprep.subr.mxu0 %v1624
      %1700 = vmatpush1.msra.mxu0 %v1623
      %1701 = vmatprep.subr.mxu0 %v1622
      %1702 = vmatpush1.msra.mxu0 %v1621
      %1703 = vmatprep.subr.mxu0 %v1620
      %1704 = vmatpush1.msra.mxu0 %v1619
      %1705 = vmatprep.subr.mxu0 %v1618
      %1706 = vmatpush1.msra.mxu0 %v1617
      %1707 = vmatprep.subr.mxu0 %v1616
      %1708 = vmatpush1.msra.mxu0 %v1615
      %1709 = vmatprep.subr.mxu0 %v1614
      %1710 = vmatpush1.msra.mxu0 %v1613
      %1711 = vmatprep.subr.mxu0 %v1612
      %1712 = vmatpush1.msra.mxu0 %v1611
      %1713 = vmatprep.subr.mxu0 %v1610
      %1714 = vmatpush1.msra.mxu0 %v1609
      %1715 = vmatprep.subr.mxu0 %v1608
      %1716 = vmatpush1.msra.mxu0 %v1607
      %1717 = vmatprep.subr.mxu0 %v1670
      %1718 = vmatpush2.msra.mxu0 %v1669
      %1719 = vmatprep.subr.mxu0 %v1668
      %1720 = vmatpush2.msra.mxu0 %v1667
      %1721 = vmatprep.subr.mxu0 %v1666
      %1722 = vmatpush2.msra.mxu0 %v1665
      %1723 = vmatprep.subr.mxu0 %v1664
      %1724 = vmatpush2.msra.mxu0 %v1663
      %1725 = vmatprep.subr.mxu0 %v1662
      %1726 = vmatpush2.msra.mxu0 %v1661
      %1727 = vmatprep.subr.mxu0 %v1660
      %1728 = vmatpush2.msra.mxu0 %v1659
      %1729 = vmatprep.subr.mxu0 %v1658
      %1730 = vmatpush2.msra.mxu0 %v1657
      %1731 = vmatprep.subr.mxu0 %v1656
      %1732 = vmatpush2.msra.mxu0 %v1655
      %1733 = vmatprep.subr.mxu0 %v1654
      %1734 = vmatpush2.msra.mxu0 %v1653
      %1735 = vmatprep.subr.mxu0 %v1652
      %1736 = vmatpush2.msra.mxu0 %v1651
      %1737 = vmatprep.subr.mxu0 %v1650
      %1738 = vmatpush2.msra.mxu0 %v1649
      %1739 = vmatprep.subr.mxu0 %v1648
      %1740 = vmatpush2.msra.mxu0 %v1647
      %1741 = vmatprep.subr.mxu0 %v1646
      %1742 = vmatpush2.msra.mxu0 %v1645
      %1743 = vmatprep.subr.mxu0 %v1644
      %1744 = vmatpush2.msra.mxu0 %v1643
      %1745 = vmatprep.subr.mxu0 %v1642
      %1746 = vmatpush2.msra.mxu0 %v1641
      %1747 = vmatprep.subr.mxu0 %v1640
      %1748 = vmatpush2.msra.mxu0 %v1639
      %1749 = vmatprep.mubr.f32.mxu0 %v1535
      %1750 = vmatmul.mubr.f32.gmra.mxu0 %v1533
      %v1751 = vpop.f32.mrf.mxu0
      %v1752 = vadd.f32 0.0, %v1751
      %v1753 = vpop.f32.mrf.mxu0
      %v1754 = vadd.f32 0.0, %v1753
      %1755 = vdwg.mxu0
      %1756 = vmatprep.subr.mxu0 0.0
      %1757 = vmatpush1.msra.mxu0 0.0
      %1758 = vmatprep.subr.mxu0 0.0
      %1759 = vmatpush1.msra.mxu0 0.0
      %1760 = vmatprep.subr.mxu0 0.0
      %1761 = vmatpush1.msra.mxu0 0.0
      %1762 = vmatprep.subr.mxu0 0.0
      %1763 = vmatpush1.msra.mxu0 0.0
      %1764 = vmatprep.subr.mxu0 0.0
      %1765 = vmatpush1.msra.mxu0 0.0
      %1766 = vmatprep.subr.mxu0 0.0
      %1767 = vmatpush1.msra.mxu0 0.0
      %1768 = vmatprep.subr.mxu0 0.0
      %1769 = vmatpush1.msra.mxu0 0.0
      %1770 = vmatprep.subr.mxu0 0.0
      %1771 = vmatpush1.msra.mxu0 0.0
      %1772 = vmatprep.subr.mxu0 0.0
      %1773 = vmatpush1.msra.mxu0 0.0
      %1774 = vmatprep.subr.mxu0 0.0
      %1775 = vmatpush1.msra.mxu0 0.0
      %1776 = vmatprep.subr.mxu0 0.0
      %1777 = vmatpush1.msra.mxu0 0.0
      %1778 = vmatprep.subr.mxu0 0.0
      %1779 = vmatpush1.msra.mxu0 0.0
      %1780 = vmatprep.subr.mxu0 0.0
      %1781 = vmatpush1.msra.mxu0 0.0
      %1782 = vmatprep.subr.mxu0 0.0
      %1783 = vmatpush1.msra.mxu0 0.0
      %1784 = vmatprep.subr.mxu0 %v1683
      %1785 = vmatpush1.msra.mxu0 %v1680
      %1786 = vmatprep.subr.mxu0 %v1672
      %1787 = vmatpush1.msra.mxu0 %v1671
      %1788 = vmatprep.subr.mxu0 0.0
      %1789 = vmatpush2.msra.mxu0 0.0
      %1790 = vmatprep.subr.mxu0 0.0
      %1791 = vmatpush2.msra.mxu0 0.0
      %1792 = vmatprep.subr.mxu0 0.0
      %1793 = vmatpush2.msra.mxu0 0.0
      %1794 = vmatprep.subr.mxu0 0.0
      %1795 = vmatpush2.msra.mxu0 0.0
      %1796 = vmatprep.subr.mxu0 0.0
      %1797 = vmatpush2.msra.mxu0 0.0
      %1798 = vmatprep.subr.mxu0 0.0
      %1799 = vmatpush2.msra.mxu0 0.0
      %1800 = vmatprep.subr.mxu0 0.0
      %1801 = vmatpush2.msra.mxu0 0.0
      %1802 = vmatprep.subr.mxu0 0.0
      %1803 = vmatpush2.msra.mxu0 0.0
      %1804 = vmatprep.subr.mxu0 0.0
      %1805 = vmatpush2.msra.mxu0 0.0
      %1806 = vmatprep.subr.mxu0 0.0
      %1807 = vmatpush2.msra.mxu0 0.0
      %1808 = vmatprep.subr.mxu0 0.0
      %1809 = vmatpush2.msra.mxu0 0.0
      %1810 = vmatprep.subr.mxu0 0.0
      %1811 = vmatpush2.msra.mxu0 0.0
      %1812 = vmatprep.subr.mxu0 0.0
      %1813 = vmatpush2.msra.mxu0 0.0
      %1814 = vmatprep.subr.mxu0 0.0
      %1815 = vmatpush2.msra.mxu0 0.0
      %1816 = vmatprep.subr.mxu0 0.0
      %1817 = vmatpush2.msra.mxu0 0.0
      %1818 = vmatprep.subr.mxu0 0.0
      %1819 = vmatpush2.msra.mxu0 0.0
      %1820 = vmatprep.mubr.f32.mxu0 0.0
      %1821 = vmatmul.mubr.f32.gmra.mxu0 %v1677
      %v1822 = vpop.f32.mrf.mxu0
      %v1823 = vadd.f32 %v1752, %v1822
      %v1824 = vpop.f32.mrf.mxu0
      %v1825 = vadd.f32 %v1754, %v1824
      %1826 = vdwg.mxu0
      %v1827 = vsub.f32 0.0, %v1823
      %v1828 = vsub.f32 0.0, %v1825
      %v1829 = vmul.f32 %v1827, 1.442695
      %v1830 = vpow.pop %v1829
      %v1831 = vmul.f32 %v1828, 1.442695
      %v1832 = vpow.pop %v1831
      %v1833 = vadd.f32 %v1830, 1.0
      %v1834 = vadd.f32 %v1832, 1.0
      %v1835 = vrcp.pop %v1833
      %v1836 = vrcp.pop %v1834
      %v1839 = vcombine.low %v1835, %v1836
      %v1841 = vunpack.c.l.s4 1966171168
      %v1842 = vunpack.c.0.s8 %v1841
      %v1843 = vlaneseq
      %v1844 = vshrl.u32 %v1843, 7
      %v1845 = vsub.s32 %v1842, %v1844
      %v1846 = vrot.slane %v1839, %v1845
      %v1848 = vunpack.c.l.s4 1966171168
      %v1849 = vunpack.c.0.s8 %v1848
      %v1850 = vlaneseq
      %v1851 = vshrl.u32 %v1850, 7
      %v1852 = vsub.s32 %v1849, %v1851
      %v1853 = vrot.slane %v1846, %v1852
      %v1855 = vlaneseq
      %vm1856 = vcmp.ge.s32.totalorder %v1855, 0
      %vm1857 = vcmp.lt.s32.totalorder %v1855, 256
      %vm1858 = vmand %vm1856, %vm1857
      %1859 = vst.msk [vmem:[%s176] sm:$0x3] %vm1858, %v1853
      %p1860 = scmp.lt.s32.totalorder %s15, 1
      %s1861 = scalar_select %p1860, %s15, 1
      %s1862 = smul.addr %s1861, 2
      %s1863 = scalar_lea.vmem %s2, %s1862
      %p1864 = scmp.lt.s32.totalorder %s15, 1
      %s1865 = scalar_select %p1864, %s15, 1
      %s1866 = smul.addr %s1865, 2
      %s1867 = smul.addr %s1866, 8
      %s1868 = scalar_lea.vmem %s3, %s1867
      // Predicated region
      $region29: #{cae3_forward.1} parent=27 // pred_check
        %p1869 = pneg %p80
      $region30: #{cae3_forward.1} parent=27 // pred_check_branch
        %1871 = sbr.rel (%p1869) target = $region32
      $region31: #{cae3_forward.1} parent=27 // pred_region
        _
      $region32: #{cae3_forward.1} parent=27 // pred_fallthru
        _
      // Predicated region
      $region33: #{cae3_forward.1} parent=27 // pred_check
        %p1872 = pneg %p106
      $region34: #{cae3_forward.1} parent=27 // pred_check_branch
        %1874 = sbr.rel (%p1872) target = $region36
      $region35: #{cae3_forward.1} parent=27 // pred_region
        _
      $region36: #{cae3_forward.1} parent=27 // pred_fallthru
        _
    $region28: #{cae3_forward.1} parent=5 // pred_fallthru
      _
    %p1875 = scmp.le.s32.totalorder 2, %s10
    // Predicated region
    $region37: #{cae3_forward.1} parent=5 // pred_check
      %p1876 = pneg %p1875
    $region38: #{cae3_forward.1} parent=5 // pred_check_branch
      %1878 = sbr.rel (%p1876) target = $region40
    $region39: #{cae3_forward.1} parent=5 // pred_region
      %s1879 = ssub.s32 %s10, 2
      // Predicated region
      $region41: #{cae3_forward.1} parent=39 // pred_check
        %p1880 = pneg %p86
      $region42: #{cae3_forward.1} parent=39 // pred_check_branch
        %1882 = sbr.rel (%p1880) target = $region44
      $region43: #{cae3_forward.1} parent=39 // pred_region
        %p1883 = scmp.lt.s32.totalorder %s16, 1
        %s1884 = scalar_select %p1883, %s16, 1
        %s1885 = smul.addr %s1884, 2
        %s1886 = scalar_lea.vmem %s2, %s1885
      $region44: #{cae3_forward.1} parent=39 // pred_fallthru
        _
      // Predicated region
      $region45: #{cae3_forward.1} parent=39 // pred_check
        %p1887 = pneg %p112
      $region46: #{cae3_forward.1} parent=39 // pred_check_branch
        %1889 = sbr.rel (%p1887) target = $region48
      $region47: #{cae3_forward.1} parent=39 // pred_region
        %p1890 = scmp.lt.s32.totalorder %s16, 1
        %s1891 = scalar_select %p1890, %s16, 1
        %s1892 = smul.addr %s1891, 2
        %s1893 = smul.addr %s1892, 8
        %s1894 = scalar_lea.vmem %s3, %s1893
      $region48: #{cae3_forward.1} parent=39 // pred_fallthru
        _
    $region40: #{cae3_forward.1} parent=5 // pred_fallthru
      _
  $region6: #{cae3_forward.1} parent=0 // loop_footer
    %s14 = sadd.s32 1, %s10
  $region7: #{cae3_forward.1} parent=0 // loop_footer_branch
    %9 = sbr.rel target = $region3
  $region8: #{cae3_forward.1} parent=0 // loop_exit
    _

</llo_original>
